<compile_context>
chip_gen: v5e
topology: v5e:2x2
jax: 0.10.0
libtpu: 0.0.40
codegen_flags: <defaults>
</compile_context>

<pallas_src>
import functools

import jax
import jax.numpy as jnp
from jax.experimental import pallas as pl
from jax.experimental.pallas import tpu as pltpu


def gru_kernel(x_ref,               # (T*B, D)   time-major, rows = t*B + b
               wih1_ref,            # (D, 3H)
               whh1_ref,            # (H, 3H)
               b1i_ref,             # (1, 3H)    bih1 with bhh1[r,z] folded in
               bhh1n_ref,           # (1, H)     bhh1[n]
               w2_ref,              # (2H, 4H)   fused layer-2 weight
               b2_ref,              # (1, 4H)    fused layer-2 bias
               wfc_ref,             # (H, 1)
               bfc_ref,             # (1, 1)
               out_ref,             # (B, 1)
               *, T, B, H):
    # ---- Batched layer-1 input projection across all time steps (one push). ----
    gi1_all = (jnp.dot(x_ref[...], wih1_ref[...],
                       preferred_element_type=jnp.float32)
               + b1i_ref[...])                       # (T*B, 3H)

    # Hoist weight/bias loads and broadcasts above the unrolled time loop
    # (JAX does not CSE broadcast_in_dim inside the loop).
    whh1 = whh1_ref[...]                             # (H, 3H)
    w2 = w2_ref[...]                                 # (2H, 4H)
    b2 = jnp.broadcast_to(b2_ref[...], (B, 4 * H))   # (B, 4H)
    bhh1n = jnp.broadcast_to(bhh1n_ref[...], (B, H))  # (B, H)

    h1 = jnp.zeros((B, H), jnp.float32)
    h2 = jnp.zeros((B, H), jnp.float32)

    # Fully unrolled recurrence (T is a small compile-time constant), keeping the
    # whole sequential chain visible to the scheduler.
    for t in range(T):
        # ---------------- Layer 1 ----------------
        gi1 = gi1_all[t * B:(t + 1) * B, :]          # (B, 3H), static row slice
        gh1 = jnp.dot(h1, whh1,
                      preferred_element_type=jnp.float32)  # (B, 3H), 1 MXU push
        rz1 = jax.nn.sigmoid(gi1[:, :2 * H] + gh1[:, :2 * H])   # one 2H-wide sigmoid
        r1 = rz1[:, :H]
        z1 = rz1[:, H:]
        n1 = jnp.tanh(gi1[:, 2 * H:] + r1 * (gh1[:, 2 * H:] + bhh1n))
        h1 = n1 + z1 * (h1 - n1)                     # == (1-z)*n + z*h

        # ---------------- Layer 2 (inference: no dropout on h1) ----------------
        hh = jnp.concatenate([h1, h2], axis=1)       # (B, 2H)
        g2 = jnp.dot(hh, w2,
                     preferred_element_type=jnp.float32) + b2  # (B, 4H), 1 MXU push
        rz2 = jax.nn.sigmoid(g2[:, :2 * H])
        r2 = rz2[:, :H]
        z2 = rz2[:, H:]
        n2 = jnp.tanh(g2[:, 2 * H:3 * H] + r2 * g2[:, 3 * H:])
        h2 = n2 + z2 * (h2 - n2)

    # ---- Final Linear(hidden, 1) on the last hidden state of layer 2. ----
    out_ref[...] = (jnp.dot(h2, wfc_ref[...],
                            preferred_element_type=jnp.float32)
                    + bfc_ref[...])


def gru_model_forward(x, params, *, hidden):
    """x: (B, T, D) float32 -> (B, 1) float32."""
    B, T, D = x.shape
    H = hidden
    # Time-major 2-D slab: row index = t*B + b.
    x2d = jnp.transpose(x, (1, 0, 2)).reshape(T * B, D)

    (wih1_t, whh1_t, b1i, bhh1n, w2, b2, wfc_t, bfc) = params

    def full(shape):
        return pl.BlockSpec(shape, lambda i: tuple(0 for _ in shape))

    kernel = functools.partial(gru_kernel, T=T, B=B, H=H)

    return pl.pallas_call(
        kernel,
        out_shape=jax.ShapeDtypeStruct((B, 1), jnp.float32),
        grid_spec=pltpu.PrefetchScalarGridSpec(
            num_scalar_prefetch=0,
            grid=(1,),                      # single grid step; time loop is in-kernel
            in_specs=[
                full((T * B, D)),           # x slab (~1.5 KB) resident in VMEM
                full((D, 3 * H)), full((H, 3 * H)),
                full((1, 3 * H)), full((1, H)),
                full((2 * H, 4 * H)), full((1, 4 * H)),
                full((H, 1)), full((1, 1)),
            ],
            out_specs=pl.BlockSpec((B, 1), lambda i: (0, 0)),
        ),
        compiler_params=pltpu.CompilerParams(
            dimension_semantics=("arbitrary",)),
    )(x2d, wih1_t, whh1_t, b1i, bhh1n, w2, b2, wfc_t, bfc)


def init_params(key, input_dim, hidden):
    """Deterministic synthetic parameters in PyTorch layout:
    nn.GRU(input_dim, hidden, num_layers=2) + nn.Linear(hidden, 1)."""
    H = hidden
    keys = jax.random.split(key, 10)
    s = 0.1

    def rnd(k, shape):
        return (s * jax.random.normal(k, shape)).astype(jnp.float32)

    wih1 = rnd(keys[0], (3 * H, input_dim))   # weight_ih_l0
    whh1 = rnd(keys[1], (3 * H, H))           # weight_hh_l0
    bih1 = rnd(keys[2], (3 * H,))
    bhh1 = rnd(keys[3], (3 * H,))
    wih2 = rnd(keys[4], (3 * H, H))           # weight_ih_l1
    whh2 = rnd(keys[5], (3 * H, H))           # weight_hh_l1
    bih2 = rnd(keys[6], (3 * H,))
    bhh2 = rnd(keys[7], (3 * H,))
    wfc = rnd(keys[8], (1, H))                # fc.weight
    bfc = rnd(keys[9], (1,))                  # fc.bias
    return (wih1, whh1, bih1, bhh1, wih2, whh2, bih2, bhh2, wfc, bfc)


def pack_params(raw, *, hidden):
    """Pack PyTorch-layout weights into the fused layout the kernel consumes."""
    (wih1, whh1, bih1, bhh1, wih2, whh2, bih2, bhh2, wfc, bfc) = raw
    H = hidden

    # Layer 1: transpose for x @ W.T; fold bhh1[r,z] into the (time-batched)
    # input-projection bias; keep bhh1[n] separate (it is multiplied by r).
    wih1_t = wih1.T                                        # (D, 3H)
    whh1_t = whh1.T                                        # (H, 3H)
    b1i = (bih1 + jnp.concatenate(
        [bhh1[:2 * H], jnp.zeros((H,), jnp.float32)])).reshape(1, 3 * H)
    bhh1n = bhh1[2 * H:].reshape(1, H)

    # Layer 2: one fused weight so [h1 | h2] @ W2 yields
    # columns [ rz pre-activation (2H) | gi_n (H) | gh_n (H) ].
    wih2_t = wih2.T                                        # (H, 3H)
    whh2_t = whh2.T                                        # (H, 3H)
    w2 = jnp.zeros((2 * H, 4 * H), jnp.float32)
    w2 = w2.at[:H, :2 * H].set(wih2_t[:, :2 * H])          # Wih for r,z
    w2 = w2.at[H:, :2 * H].set(whh2_t[:, :2 * H])          # Whh for r,z
    w2 = w2.at[:H, 2 * H:3 * H].set(wih2_t[:, 2 * H:])     # Wih for n
    w2 = w2.at[H:, 3 * H:].set(whh2_t[:, 2 * H:])          # Whh for n
    b2 = jnp.concatenate([bih2[:2 * H] + bhh2[:2 * H],     # fused r,z bias
                          bih2[2 * H:],                    # n input bias
                          bhh2[2 * H:]]).reshape(1, 4 * H)  # n hidden bias

    wfc_t = wfc.T                                          # (H, 1)
    bfc2 = bfc.reshape(1, 1)
    return (wih1_t, whh1_t, b1i, bhh1n, w2, b2, wfc_t, bfc2)


def gru_model_ref(x, raw, *, hidden):
    """Pure-JAX reference with PyTorch nn.GRU semantics (raw PyTorch-layout weights)."""
    (wih1, whh1, bih1, bhh1, wih2, whh2, bih2, bhh2, wfc, bfc) = raw
    B, T, D = x.shape
    H = hidden

    def cell(x_t, h, wih, whh, b_ih, b_hh):
        gi = x_t @ wih.T + b_ih
        gh = h @ whh.T + b_hh
        r = jax.nn.sigmoid(gi[:, :H] + gh[:, :H])
        z = jax.nn.sigmoid(gi[:, H:2 * H] + gh[:, H:2 * H])
        n = jnp.tanh(gi[:, 2 * H:] + r * gh[:, 2 * H:])
        return (1.0 - z) * n + z * h

    def step(carry, x_t):
        h1, h2 = carry
        h1 = cell(x_t, h1, wih1, whh1, bih1, bhh1)
        h2 = cell(h1, h2, wih2, whh2, bih2, bhh2)
        return (h1, h2), None

    h0 = (jnp.zeros((B, H), jnp.float32), jnp.zeros((B, H), jnp.float32))
    (h1, h2), _ = jax.lax.scan(step, h0, jnp.transpose(x, (1, 0, 2)))
    return h2 @ wfc.T + bfc


if __name__ == "__main__":
    # Small shapes consistent with the module's forward: (batch, seq, input_dim).
    batch, seq, input_dim, hidden = 2, 8, 24, 32

    key = jax.random.PRNGKey(0)
    k_x, k_p = jax.random.split(key)
    x = jax.random.normal(k_x, (batch, seq, input_dim), dtype=jnp.float32)

    raw = init_params(k_p, input_dim, hidden)
    params = pack_params(raw, hidden=hidden)

    out = jax.block_until_ready(gru_model_forward(x, params, hidden=hidden))
    ref = jax.block_until_ready(gru_model_ref(x, raw, hidden=hidden))

    assert out.shape == (batch, 1)
    assert jnp.allclose(out, ref, atol=1e-5, rtol=1e-5), (out, ref)

    print("KERNEL_OK")
</pallas_src>

<mosaic_0001>
module attributes {stable_mosaic.version = 11 : i64} {
  func.func @gru_kernel(%arg0: i32, %arg1: memref<16x24xf32, #tpu.memory_space<vmem>>, %arg2: memref<24x96xf32, #tpu.memory_space<vmem>>, %arg3: memref<32x96xf32, #tpu.memory_space<vmem>>, %arg4: memref<1x96xf32, #tpu.memory_space<vmem>>, %arg5: memref<1x32xf32, #tpu.memory_space<vmem>>, %arg6: memref<64x128xf32, #tpu.memory_space<vmem>>, %arg7: memref<1x128xf32, #tpu.memory_space<vmem>>, %arg8: memref<32x1xf32, #tpu.memory_space<vmem>>, %arg9: memref<1x1xf32, #tpu.memory_space<vmem>>, %arg10: memref<2x1xf32, #tpu.memory_space<vmem>>) attributes {dimension_semantics = [#tpu.dimension_semantics<arbitrary>], iteration_bounds = array<i64: 1>, scalar_prefetch = 0 : i64, scratch_operands = 0 : i64, tpu.core_type = #tpu.core_type<tc>, window_params = [{pipeline_mode = #tpu.pipeline_mode<synchronous>, transform_indices = @transform_0, window_bounds = array<i64: 16, 24>}, {pipeline_mode = #tpu.pipeline_mode<synchronous>, transform_indices = @transform_1, window_bounds = array<i64: 24, 96>}, {pipeline_mode = #tpu.pipeline_mode<synchronous>, transform_indices = @transform_2, window_bounds = array<i64: 32, 96>}, {pipeline_mode = #tpu.pipeline_mode<synchronous>, transform_indices = @transform_3, window_bounds = array<i64: 1, 96>}, {pipeline_mode = #tpu.pipeline_mode<synchronous>, transform_indices = @transform_4, window_bounds = array<i64: 1, 32>}, {pipeline_mode = #tpu.pipeline_mode<synchronous>, transform_indices = @transform_5, window_bounds = array<i64: 64, 128>}, {pipeline_mode = #tpu.pipeline_mode<synchronous>, transform_indices = @transform_6, window_bounds = array<i64: 1, 128>}, {pipeline_mode = #tpu.pipeline_mode<synchronous>, transform_indices = @transform_7, window_bounds = array<i64: 32, 1>}, {pipeline_mode = #tpu.pipeline_mode<synchronous>, transform_indices = @transform_8, window_bounds = array<i64: 1, 1>}, {pipeline_mode = #tpu.pipeline_mode<synchronous>, transform_indices = @transform_9, window_bounds = array<i64: 2, 1>}]} {
    %c0 = arith.constant 0 : index
    %c0_0 = arith.constant 0 : index
    %0 = vector.load %arg1[%c0, %c0_0] : memref<16x24xf32, #tpu.memory_space<vmem>>, vector<16x24xf32>
    %c0_1 = arith.constant 0 : index
    %c0_2 = arith.constant 0 : index
    %1 = vector.load %arg2[%c0_1, %c0_2] : memref<24x96xf32, #tpu.memory_space<vmem>>, vector<24x96xf32>
    %cst = arith.constant dense<0.000000e+00> : vector<16x96xf32>
    %2 = tpu.matmul %0, %1, %cst {dimension_numbers = #tpu.dot_dimension_numbers<[1], [0], [0], [1], [0, 0, 1, 1], [], []>} : vector<16x24xf32>, vector<24x96xf32>, vector<16x96xf32> -> vector<16x96xf32>
    %c0_3 = arith.constant 0 : index
    %c0_4 = arith.constant 0 : index
    %3 = vector.load %arg4[%c0_3, %c0_4] : memref<1x96xf32, #tpu.memory_space<vmem>>, vector<1x96xf32>
    %4 = vector.broadcast %3 : vector<1x96xf32> to vector<16x96xf32>
    %5 = arith.addf %2, %4 : vector<16x96xf32>
    %c0_5 = arith.constant 0 : index
    %c0_6 = arith.constant 0 : index
    %6 = vector.load %arg3[%c0_5, %c0_6] : memref<32x96xf32, #tpu.memory_space<vmem>>, vector<32x96xf32>
    %c0_7 = arith.constant 0 : index
    %c0_8 = arith.constant 0 : index
    %7 = vector.load %arg6[%c0_7, %c0_8] : memref<64x128xf32, #tpu.memory_space<vmem>>, vector<64x128xf32>
    %c0_9 = arith.constant 0 : index
    %c0_10 = arith.constant 0 : index
    %8 = vector.load %arg7[%c0_9, %c0_10] : memref<1x128xf32, #tpu.memory_space<vmem>>, vector<1x128xf32>
    %9 = vector.shape_cast %8 : vector<1x128xf32> to vector<1x128xf32>
    %10 = vector.broadcast %9 : vector<1x128xf32> to vector<2x128xf32>
    %c0_11 = arith.constant 0 : index
    %c0_12 = arith.constant 0 : index
    %11 = vector.load %arg5[%c0_11, %c0_12] : memref<1x32xf32, #tpu.memory_space<vmem>>, vector<1x32xf32>
    %12 = vector.shape_cast %11 : vector<1x32xf32> to vector<1x32xf32>
    %13 = vector.broadcast %12 : vector<1x32xf32> to vector<2x32xf32>
    %cst_13 = arith.constant 0.000000e+00 : f32
    %14 = vector.broadcast %cst_13 : f32 to vector<2x32xf32>
    %cst_14 = arith.constant 0.000000e+00 : f32
    %15 = vector.broadcast %cst_14 : f32 to vector<2x32xf32>
    %16 = vector.extract_strided_slice %5 {offsets = [0, 0], sizes = [2, 96], strides = [1, 1]} : vector<16x96xf32> to vector<2x96xf32>
    %cst_15 = arith.constant dense<0.000000e+00> : vector<2x96xf32>
    %17 = tpu.matmul %14, %6, %cst_15 {dimension_numbers = #tpu.dot_dimension_numbers<[1], [0], [0], [1], [0, 0, 1, 1], [], []>} : vector<2x32xf32>, vector<32x96xf32>, vector<2x96xf32> -> vector<2x96xf32>
    %18 = vector.extract_strided_slice %16 {offsets = [0, 0], sizes = [2, 64], strides = [1, 1]} : vector<2x96xf32> to vector<2x64xf32>
    %19 = vector.extract_strided_slice %17 {offsets = [0, 0], sizes = [2, 64], strides = [1, 1]} : vector<2x96xf32> to vector<2x64xf32>
    %20 = arith.addf %18, %19 : vector<2x64xf32>
    %21 = arith.negf %20 : vector<2x64xf32>
    %22 = math.exp %21 : vector<2x64xf32>
    %cst_16 = arith.constant 1.000000e+00 : f32
    %23 = vector.broadcast %cst_16 : f32 to vector<2x64xf32>
    %24 = arith.addf %23, %22 : vector<2x64xf32>
    %25 = arith.divf %23, %24 : vector<2x64xf32>
    %26 = vector.extract_strided_slice %25 {offsets = [0, 0], sizes = [2, 32], strides = [1, 1]} : vector<2x64xf32> to vector<2x32xf32>
    %27 = vector.extract_strided_slice %25 {offsets = [0, 32], sizes = [2, 32], strides = [1, 1]} : vector<2x64xf32> to vector<2x32xf32>
    %28 = vector.extract_strided_slice %16 {offsets = [0, 64], sizes = [2, 32], strides = [1, 1]} : vector<2x96xf32> to vector<2x32xf32>
    %29 = vector.extract_strided_slice %17 {offsets = [0, 64], sizes = [2, 32], strides = [1, 1]} : vector<2x96xf32> to vector<2x32xf32>
    %30 = arith.addf %29, %13 : vector<2x32xf32>
    %31 = arith.mulf %26, %30 : vector<2x32xf32>
    %32 = arith.addf %28, %31 : vector<2x32xf32>
    %33 = math.tanh %32 : vector<2x32xf32>
    %34 = arith.subf %14, %33 : vector<2x32xf32>
    %35 = arith.mulf %27, %34 : vector<2x32xf32>
    %36 = arith.addf %33, %35 : vector<2x32xf32>
    %37 = tpu.concatenate %36, %15 in 1 : vector<2x32xf32>, vector<2x32xf32> -> vector<2x64xf32>
    %cst_17 = arith.constant dense<0.000000e+00> : vector<2x128xf32>
    %38 = tpu.matmul %37, %7, %cst_17 {dimension_numbers = #tpu.dot_dimension_numbers<[1], [0], [0], [1], [0, 0, 1, 1], [], []>} : vector<2x64xf32>, vector<64x128xf32>, vector<2x128xf32> -> vector<2x128xf32>
    %39 = arith.addf %38, %10 : vector<2x128xf32>
    %40 = vector.extract_strided_slice %39 {offsets = [0, 0], sizes = [2, 64], strides = [1, 1]} : vector<2x128xf32> to vector<2x64xf32>
    %41 = arith.negf %40 : vector<2x64xf32>
    %42 = math.exp %41 : vector<2x64xf32>
    %cst_18 = arith.constant 1.000000e+00 : f32
    %43 = vector.broadcast %cst_18 : f32 to vector<2x64xf32>
    %44 = arith.addf %43, %42 : vector<2x64xf32>
    %45 = arith.divf %43, %44 : vector<2x64xf32>
    %46 = vector.extract_strided_slice %45 {offsets = [0, 0], sizes = [2, 32], strides = [1, 1]} : vector<2x64xf32> to vector<2x32xf32>
    %47 = vector.extract_strided_slice %45 {offsets = [0, 32], sizes = [2, 32], strides = [1, 1]} : vector<2x64xf32> to vector<2x32xf32>
    %48 = vector.extract_strided_slice %39 {offsets = [0, 64], sizes = [2, 32], strides = [1, 1]} : vector<2x128xf32> to vector<2x32xf32>
    %49 = vector.extract_strided_slice %39 {offsets = [0, 96], sizes = [2, 32], strides = [1, 1]} : vector<2x128xf32> to vector<2x32xf32>
    %50 = arith.mulf %46, %49 : vector<2x32xf32>
    %51 = arith.addf %48, %50 : vector<2x32xf32>
    %52 = math.tanh %51 : vector<2x32xf32>
    %53 = arith.subf %15, %52 : vector<2x32xf32>
    %54 = arith.mulf %47, %53 : vector<2x32xf32>
    %55 = arith.addf %52, %54 : vector<2x32xf32>
    %56 = vector.extract_strided_slice %5 {offsets = [2, 0], sizes = [2, 96], strides = [1, 1]} : vector<16x96xf32> to vector<2x96xf32>
    %cst_19 = arith.constant dense<0.000000e+00> : vector<2x96xf32>
    %57 = tpu.matmul %36, %6, %cst_19 {dimension_numbers = #tpu.dot_dimension_numbers<[1], [0], [0], [1], [0, 0, 1, 1], [], []>} : vector<2x32xf32>, vector<32x96xf32>, vector<2x96xf32> -> vector<2x96xf32>
    %58 = vector.extract_strided_slice %56 {offsets = [0, 0], sizes = [2, 64], strides = [1, 1]} : vector<2x96xf32> to vector<2x64xf32>
    %59 = vector.extract_strided_slice %57 {offsets = [0, 0], sizes = [2, 64], strides = [1, 1]} : vector<2x96xf32> to vector<2x64xf32>
    %60 = arith.addf %58, %59 : vector<2x64xf32>
    %61 = arith.negf %60 : vector<2x64xf32>
    %62 = math.exp %61 : vector<2x64xf32>
    %cst_20 = arith.constant 1.000000e+00 : f32
    %63 = vector.broadcast %cst_20 : f32 to vector<2x64xf32>
    %64 = arith.addf %63, %62 : vector<2x64xf32>
    %65 = arith.divf %63, %64 : vector<2x64xf32>
    %66 = vector.extract_strided_slice %65 {offsets = [0, 0], sizes = [2, 32], strides = [1, 1]} : vector<2x64xf32> to vector<2x32xf32>
    %67 = vector.extract_strided_slice %65 {offsets = [0, 32], sizes = [2, 32], strides = [1, 1]} : vector<2x64xf32> to vector<2x32xf32>
    %68 = vector.extract_strided_slice %56 {offsets = [0, 64], sizes = [2, 32], strides = [1, 1]} : vector<2x96xf32> to vector<2x32xf32>
    %69 = vector.extract_strided_slice %57 {offsets = [0, 64], sizes = [2, 32], strides = [1, 1]} : vector<2x96xf32> to vector<2x32xf32>
    %70 = arith.addf %69, %13 : vector<2x32xf32>
    %71 = arith.mulf %66, %70 : vector<2x32xf32>
    %72 = arith.addf %68, %71 : vector<2x32xf32>
    %73 = math.tanh %72 : vector<2x32xf32>
    %74 = arith.subf %36, %73 : vector<2x32xf32>
    %75 = arith.mulf %67, %74 : vector<2x32xf32>
    %76 = arith.addf %73, %75 : vector<2x32xf32>
    %77 = tpu.concatenate %76, %55 in 1 : vector<2x32xf32>, vector<2x32xf32> -> vector<2x64xf32>
    %cst_21 = arith.constant dense<0.000000e+00> : vector<2x128xf32>
    %78 = tpu.matmul %77, %7, %cst_21 {dimension_numbers = #tpu.dot_dimension_numbers<[1], [0], [0], [1], [0, 0, 1, 1], [], []>} : vector<2x64xf32>, vector<64x128xf32>, vector<2x128xf32> -> vector<2x128xf32>
    %79 = arith.addf %78, %10 : vector<2x128xf32>
    %80 = vector.extract_strided_slice %79 {offsets = [0, 0], sizes = [2, 64], strides = [1, 1]} : vector<2x128xf32> to vector<2x64xf32>
    %81 = arith.negf %80 : vector<2x64xf32>
    %82 = math.exp %81 : vector<2x64xf32>
    %cst_22 = arith.constant 1.000000e+00 : f32
    %83 = vector.broadcast %cst_22 : f32 to vector<2x64xf32>
    %84 = arith.addf %83, %82 : vector<2x64xf32>
    %85 = arith.divf %83, %84 : vector<2x64xf32>
    %86 = vector.extract_strided_slice %85 {offsets = [0, 0], sizes = [2, 32], strides = [1, 1]} : vector<2x64xf32> to vector<2x32xf32>
    %87 = vector.extract_strided_slice %85 {offsets = [0, 32], sizes = [2, 32], strides = [1, 1]} : vector<2x64xf32> to vector<2x32xf32>
    %88 = vector.extract_strided_slice %79 {offsets = [0, 64], sizes = [2, 32], strides = [1, 1]} : vector<2x128xf32> to vector<2x32xf32>
    %89 = vector.extract_strided_slice %79 {offsets = [0, 96], sizes = [2, 32], strides = [1, 1]} : vector<2x128xf32> to vector<2x32xf32>
    %90 = arith.mulf %86, %89 : vector<2x32xf32>
    %91 = arith.addf %88, %90 : vector<2x32xf32>
    %92 = math.tanh %91 : vector<2x32xf32>
    %93 = arith.subf %55, %92 : vector<2x32xf32>
    %94 = arith.mulf %87, %93 : vector<2x32xf32>
    %95 = arith.addf %92, %94 : vector<2x32xf32>
    %96 = vector.extract_strided_slice %5 {offsets = [4, 0], sizes = [2, 96], strides = [1, 1]} : vector<16x96xf32> to vector<2x96xf32>
    %cst_23 = arith.constant dense<0.000000e+00> : vector<2x96xf32>
    %97 = tpu.matmul %76, %6, %cst_23 {dimension_numbers = #tpu.dot_dimension_numbers<[1], [0], [0], [1], [0, 0, 1, 1], [], []>} : vector<2x32xf32>, vector<32x96xf32>, vector<2x96xf32> -> vector<2x96xf32>
    %98 = vector.extract_strided_slice %96 {offsets = [0, 0], sizes = [2, 64], strides = [1, 1]} : vector<2x96xf32> to vector<2x64xf32>
    %99 = vector.extract_strided_slice %97 {offsets = [0, 0], sizes = [2, 64], strides = [1, 1]} : vector<2x96xf32> to vector<2x64xf32>
    %100 = arith.addf %98, %99 : vector<2x64xf32>
    %101 = arith.negf %100 : vector<2x64xf32>
    %102 = math.exp %101 : vector<2x64xf32>
    %cst_24 = arith.constant 1.000000e+00 : f32
    %103 = vector.broadcast %cst_24 : f32 to vector<2x64xf32>
    %104 = arith.addf %103, %102 : vector<2x64xf32>
    %105 = arith.divf %103, %104 : vector<2x64xf32>
    %106 = vector.extract_strided_slice %105 {offsets = [0, 0], sizes = [2, 32], strides = [1, 1]} : vector<2x64xf32> to vector<2x32xf32>
    %107 = vector.extract_strided_slice %105 {offsets = [0, 32], sizes = [2, 32], strides = [1, 1]} : vector<2x64xf32> to vector<2x32xf32>
    %108 = vector.extract_strided_slice %96 {offsets = [0, 64], sizes = [2, 32], strides = [1, 1]} : vector<2x96xf32> to vector<2x32xf32>
    %109 = vector.extract_strided_slice %97 {offsets = [0, 64], sizes = [2, 32], strides = [1, 1]} : vector<2x96xf32> to vector<2x32xf32>
    %110 = arith.addf %109, %13 : vector<2x32xf32>
    %111 = arith.mulf %106, %110 : vector<2x32xf32>
    %112 = arith.addf %108, %111 : vector<2x32xf32>
    %113 = math.tanh %112 : vector<2x32xf32>
    %114 = arith.subf %76, %113 : vector<2x32xf32>
    %115 = arith.mulf %107, %114 : vector<2x32xf32>
    %116 = arith.addf %113, %115 : vector<2x32xf32>
    %117 = tpu.concatenate %116, %95 in 1 : vector<2x32xf32>, vector<2x32xf32> -> vector<2x64xf32>
    %cst_25 = arith.constant dense<0.000000e+00> : vector<2x128xf32>
    %118 = tpu.matmul %117, %7, %cst_25 {dimension_numbers = #tpu.dot_dimension_numbers<[1], [0], [0], [1], [0, 0, 1, 1], [], []>} : vector<2x64xf32>, vector<64x128xf32>, vector<2x128xf32> -> vector<2x128xf32>
    %119 = arith.addf %118, %10 : vector<2x128xf32>
    %120 = vector.extract_strided_slice %119 {offsets = [0, 0], sizes = [2, 64], strides = [1, 1]} : vector<2x128xf32> to vector<2x64xf32>
    %121 = arith.negf %120 : vector<2x64xf32>
    %122 = math.exp %121 : vector<2x64xf32>
    %cst_26 = arith.constant 1.000000e+00 : f32
    %123 = vector.broadcast %cst_26 : f32 to vector<2x64xf32>
    %124 = arith.addf %123, %122 : vector<2x64xf32>
    %125 = arith.divf %123, %124 : vector<2x64xf32>
    %126 = vector.extract_strided_slice %125 {offsets = [0, 0], sizes = [2, 32], strides = [1, 1]} : vector<2x64xf32> to vector<2x32xf32>
    %127 = vector.extract_strided_slice %125 {offsets = [0, 32], sizes = [2, 32], strides = [1, 1]} : vector<2x64xf32> to vector<2x32xf32>
    %128 = vector.extract_strided_slice %119 {offsets = [0, 64], sizes = [2, 32], strides = [1, 1]} : vector<2x128xf32> to vector<2x32xf32>
    %129 = vector.extract_strided_slice %119 {offsets = [0, 96], sizes = [2, 32], strides = [1, 1]} : vector<2x128xf32> to vector<2x32xf32>
    %130 = arith.mulf %126, %129 : vector<2x32xf32>
    %131 = arith.addf %128, %130 : vector<2x32xf32>
    %132 = math.tanh %131 : vector<2x32xf32>
    %133 = arith.subf %95, %132 : vector<2x32xf32>
    %134 = arith.mulf %127, %133 : vector<2x32xf32>
    %135 = arith.addf %132, %134 : vector<2x32xf32>
    %136 = vector.extract_strided_slice %5 {offsets = [6, 0], sizes = [2, 96], strides = [1, 1]} : vector<16x96xf32> to vector<2x96xf32>
    %cst_27 = arith.constant dense<0.000000e+00> : vector<2x96xf32>
    %137 = tpu.matmul %116, %6, %cst_27 {dimension_numbers = #tpu.dot_dimension_numbers<[1], [0], [0], [1], [0, 0, 1, 1], [], []>} : vector<2x32xf32>, vector<32x96xf32>, vector<2x96xf32> -> vector<2x96xf32>
    %138 = vector.extract_strided_slice %136 {offsets = [0, 0], sizes = [2, 64], strides = [1, 1]} : vector<2x96xf32> to vector<2x64xf32>
    %139 = vector.extract_strided_slice %137 {offsets = [0, 0], sizes = [2, 64], strides = [1, 1]} : vector<2x96xf32> to vector<2x64xf32>
    %140 = arith.addf %138, %139 : vector<2x64xf32>
    %141 = arith.negf %140 : vector<2x64xf32>
    %142 = math.exp %141 : vector<2x64xf32>
    %cst_28 = arith.constant 1.000000e+00 : f32
    %143 = vector.broadcast %cst_28 : f32 to vector<2x64xf32>
    %144 = arith.addf %143, %142 : vector<2x64xf32>
    %145 = arith.divf %143, %144 : vector<2x64xf32>
    %146 = vector.extract_strided_slice %145 {offsets = [0, 0], sizes = [2, 32], strides = [1, 1]} : vector<2x64xf32> to vector<2x32xf32>
    %147 = vector.extract_strided_slice %145 {offsets = [0, 32], sizes = [2, 32], strides = [1, 1]} : vector<2x64xf32> to vector<2x32xf32>
    %148 = vector.extract_strided_slice %136 {offsets = [0, 64], sizes = [2, 32], strides = [1, 1]} : vector<2x96xf32> to vector<2x32xf32>
    %149 = vector.extract_strided_slice %137 {offsets = [0, 64], sizes = [2, 32], strides = [1, 1]} : vector<2x96xf32> to vector<2x32xf32>
    %150 = arith.addf %149, %13 : vector<2x32xf32>
    %151 = arith.mulf %146, %150 : vector<2x32xf32>
    %152 = arith.addf %148, %151 : vector<2x32xf32>
    %153 = math.tanh %152 : vector<2x32xf32>
    %154 = arith.subf %116, %153 : vector<2x32xf32>
    %155 = arith.mulf %147, %154 : vector<2x32xf32>
    %156 = arith.addf %153, %155 : vector<2x32xf32>
    %157 = tpu.concatenate %156, %135 in 1 : vector<2x32xf32>, vector<2x32xf32> -> vector<2x64xf32>
    %cst_29 = arith.constant dense<0.000000e+00> : vector<2x128xf32>
    %158 = tpu.matmul %157, %7, %cst_29 {dimension_numbers = #tpu.dot_dimension_numbers<[1], [0], [0], [1], [0, 0, 1, 1], [], []>} : vector<2x64xf32>, vector<64x128xf32>, vector<2x128xf32> -> vector<2x128xf32>
    %159 = arith.addf %158, %10 : vector<2x128xf32>
    %160 = vector.extract_strided_slice %159 {offsets = [0, 0], sizes = [2, 64], strides = [1, 1]} : vector<2x128xf32> to vector<2x64xf32>
    %161 = arith.negf %160 : vector<2x64xf32>
    %162 = math.exp %161 : vector<2x64xf32>
    %cst_30 = arith.constant 1.000000e+00 : f32
    %163 = vector.broadcast %cst_30 : f32 to vector<2x64xf32>
    %164 = arith.addf %163, %162 : vector<2x64xf32>
    %165 = arith.divf %163, %164 : vector<2x64xf32>
    %166 = vector.extract_strided_slice %165 {offsets = [0, 0], sizes = [2, 32], strides = [1, 1]} : vector<2x64xf32> to vector<2x32xf32>
    %167 = vector.extract_strided_slice %165 {offsets = [0, 32], sizes = [2, 32], strides = [1, 1]} : vector<2x64xf32> to vector<2x32xf32>
    %168 = vector.extract_strided_slice %159 {offsets = [0, 64], sizes = [2, 32], strides = [1, 1]} : vector<2x128xf32> to vector<2x32xf32>
    %169 = vector.extract_strided_slice %159 {offsets = [0, 96], sizes = [2, 32], strides = [1, 1]} : vector<2x128xf32> to vector<2x32xf32>
    %170 = arith.mulf %166, %169 : vector<2x32xf32>
    %171 = arith.addf %168, %170 : vector<2x32xf32>
    %172 = math.tanh %171 : vector<2x32xf32>
    %173 = arith.subf %135, %172 : vector<2x32xf32>
    %174 = arith.mulf %167, %173 : vector<2x32xf32>
    %175 = arith.addf %172, %174 : vector<2x32xf32>
    %176 = vector.extract_strided_slice %5 {offsets = [8, 0], sizes = [2, 96], strides = [1, 1]} : vector<16x96xf32> to vector<2x96xf32>
    %cst_31 = arith.constant dense<0.000000e+00> : vector<2x96xf32>
    %177 = tpu.matmul %156, %6, %cst_31 {dimension_numbers = #tpu.dot_dimension_numbers<[1], [0], [0], [1], [0, 0, 1, 1], [], []>} : vector<2x32xf32>, vector<32x96xf32>, vector<2x96xf32> -> vector<2x96xf32>
    %178 = vector.extract_strided_slice %176 {offsets = [0, 0], sizes = [2, 64], strides = [1, 1]} : vector<2x96xf32> to vector<2x64xf32>
    %179 = vector.extract_strided_slice %177 {offsets = [0, 0], sizes = [2, 64], strides = [1, 1]} : vector<2x96xf32> to vector<2x64xf32>
    %180 = arith.addf %178, %179 : vector<2x64xf32>
    %181 = arith.negf %180 : vector<2x64xf32>
    %182 = math.exp %181 : vector<2x64xf32>
    %cst_32 = arith.constant 1.000000e+00 : f32
    %183 = vector.broadcast %cst_32 : f32 to vector<2x64xf32>
    %184 = arith.addf %183, %182 : vector<2x64xf32>
    %185 = arith.divf %183, %184 : vector<2x64xf32>
    %186 = vector.extract_strided_slice %185 {offsets = [0, 0], sizes = [2, 32], strides = [1, 1]} : vector<2x64xf32> to vector<2x32xf32>
    %187 = vector.extract_strided_slice %185 {offsets = [0, 32], sizes = [2, 32], strides = [1, 1]} : vector<2x64xf32> to vector<2x32xf32>
    %188 = vector.extract_strided_slice %176 {offsets = [0, 64], sizes = [2, 32], strides = [1, 1]} : vector<2x96xf32> to vector<2x32xf32>
    %189 = vector.extract_strided_slice %177 {offsets = [0, 64], sizes = [2, 32], strides = [1, 1]} : vector<2x96xf32> to vector<2x32xf32>
    %190 = arith.addf %189, %13 : vector<2x32xf32>
    %191 = arith.mulf %186, %190 : vector<2x32xf32>
    %192 = arith.addf %188, %191 : vector<2x32xf32>
    %193 = math.tanh %192 : vector<2x32xf32>
    %194 = arith.subf %156, %193 : vector<2x32xf32>
    %195 = arith.mulf %187, %194 : vector<2x32xf32>
    %196 = arith.addf %193, %195 : vector<2x32xf32>
    %197 = tpu.concatenate %196, %175 in 1 : vector<2x32xf32>, vector<2x32xf32> -> vector<2x64xf32>
    %cst_33 = arith.constant dense<0.000000e+00> : vector<2x128xf32>
    %198 = tpu.matmul %197, %7, %cst_33 {dimension_numbers = #tpu.dot_dimension_numbers<[1], [0], [0], [1], [0, 0, 1, 1], [], []>} : vector<2x64xf32>, vector<64x128xf32>, vector<2x128xf32> -> vector<2x128xf32>
    %199 = arith.addf %198, %10 : vector<2x128xf32>
    %200 = vector.extract_strided_slice %199 {offsets = [0, 0], sizes = [2, 64], strides = [1, 1]} : vector<2x128xf32> to vector<2x64xf32>
    %201 = arith.negf %200 : vector<2x64xf32>
    %202 = math.exp %201 : vector<2x64xf32>
    %cst_34 = arith.constant 1.000000e+00 : f32
    %203 = vector.broadcast %cst_34 : f32 to vector<2x64xf32>
    %204 = arith.addf %203, %202 : vector<2x64xf32>
    %205 = arith.divf %203, %204 : vector<2x64xf32>
    %206 = vector.extract_strided_slice %205 {offsets = [0, 0], sizes = [2, 32], strides = [1, 1]} : vector<2x64xf32> to vector<2x32xf32>
    %207 = vector.extract_strided_slice %205 {offsets = [0, 32], sizes = [2, 32], strides = [1, 1]} : vector<2x64xf32> to vector<2x32xf32>
    %208 = vector.extract_strided_slice %199 {offsets = [0, 64], sizes = [2, 32], strides = [1, 1]} : vector<2x128xf32> to vector<2x32xf32>
    %209 = vector.extract_strided_slice %199 {offsets = [0, 96], sizes = [2, 32], strides = [1, 1]} : vector<2x128xf32> to vector<2x32xf32>
    %210 = arith.mulf %206, %209 : vector<2x32xf32>
    %211 = arith.addf %208, %210 : vector<2x32xf32>
    %212 = math.tanh %211 : vector<2x32xf32>
    %213 = arith.subf %175, %212 : vector<2x32xf32>
    %214 = arith.mulf %207, %213 : vector<2x32xf32>
    %215 = arith.addf %212, %214 : vector<2x32xf32>
    %216 = vector.extract_strided_slice %5 {offsets = [10, 0], sizes = [2, 96], strides = [1, 1]} : vector<16x96xf32> to vector<2x96xf32>
    %cst_35 = arith.constant dense<0.000000e+00> : vector<2x96xf32>
    %217 = tpu.matmul %196, %6, %cst_35 {dimension_numbers = #tpu.dot_dimension_numbers<[1], [0], [0], [1], [0, 0, 1, 1], [], []>} : vector<2x32xf32>, vector<32x96xf32>, vector<2x96xf32> -> vector<2x96xf32>
    %218 = vector.extract_strided_slice %216 {offsets = [0, 0], sizes = [2, 64], strides = [1, 1]} : vector<2x96xf32> to vector<2x64xf32>
    %219 = vector.extract_strided_slice %217 {offsets = [0, 0], sizes = [2, 64], strides = [1, 1]} : vector<2x96xf32> to vector<2x64xf32>
    %220 = arith.addf %218, %219 : vector<2x64xf32>
    %221 = arith.negf %220 : vector<2x64xf32>
    %222 = math.exp %221 : vector<2x64xf32>
    %cst_36 = arith.constant 1.000000e+00 : f32
    %223 = vector.broadcast %cst_36 : f32 to vector<2x64xf32>
    %224 = arith.addf %223, %222 : vector<2x64xf32>
    %225 = arith.divf %223, %224 : vector<2x64xf32>
    %226 = vector.extract_strided_slice %225 {offsets = [0, 0], sizes = [2, 32], strides = [1, 1]} : vector<2x64xf32> to vector<2x32xf32>
    %227 = vector.extract_strided_slice %225 {offsets = [0, 32], sizes = [2, 32], strides = [1, 1]} : vector<2x64xf32> to vector<2x32xf32>
    %228 = vector.extract_strided_slice %216 {offsets = [0, 64], sizes = [2, 32], strides = [1, 1]} : vector<2x96xf32> to vector<2x32xf32>
    %229 = vector.extract_strided_slice %217 {offsets = [0, 64], sizes = [2, 32], strides = [1, 1]} : vector<2x96xf32> to vector<2x32xf32>
    %230 = arith.addf %229, %13 : vector<2x32xf32>
    %231 = arith.mulf %226, %230 : vector<2x32xf32>
    %232 = arith.addf %228, %231 : vector<2x32xf32>
    %233 = math.tanh %232 : vector<2x32xf32>
    %234 = arith.subf %196, %233 : vector<2x32xf32>
    %235 = arith.mulf %227, %234 : vector<2x32xf32>
    %236 = arith.addf %233, %235 : vector<2x32xf32>
    %237 = tpu.concatenate %236, %215 in 1 : vector<2x32xf32>, vector<2x32xf32> -> vector<2x64xf32>
    %cst_37 = arith.constant dense<0.000000e+00> : vector<2x128xf32>
    %238 = tpu.matmul %237, %7, %cst_37 {dimension_numbers = #tpu.dot_dimension_numbers<[1], [0], [0], [1], [0, 0, 1, 1], [], []>} : vector<2x64xf32>, vector<64x128xf32>, vector<2x128xf32> -> vector<2x128xf32>
    %239 = arith.addf %238, %10 : vector<2x128xf32>
    %240 = vector.extract_strided_slice %239 {offsets = [0, 0], sizes = [2, 64], strides = [1, 1]} : vector<2x128xf32> to vector<2x64xf32>
    %241 = arith.negf %240 : vector<2x64xf32>
    %242 = math.exp %241 : vector<2x64xf32>
    %cst_38 = arith.constant 1.000000e+00 : f32
    %243 = vector.broadcast %cst_38 : f32 to vector<2x64xf32>
    %244 = arith.addf %243, %242 : vector<2x64xf32>
    %245 = arith.divf %243, %244 : vector<2x64xf32>
    %246 = vector.extract_strided_slice %245 {offsets = [0, 0], sizes = [2, 32], strides = [1, 1]} : vector<2x64xf32> to vector<2x32xf32>
    %247 = vector.extract_strided_slice %245 {offsets = [0, 32], sizes = [2, 32], strides = [1, 1]} : vector<2x64xf32> to vector<2x32xf32>
    %248 = vector.extract_strided_slice %239 {offsets = [0, 64], sizes = [2, 32], strides = [1, 1]} : vector<2x128xf32> to vector<2x32xf32>
    %249 = vector.extract_strided_slice %239 {offsets = [0, 96], sizes = [2, 32], strides = [1, 1]} : vector<2x128xf32> to vector<2x32xf32>
    %250 = arith.mulf %246, %249 : vector<2x32xf32>
    %251 = arith.addf %248, %250 : vector<2x32xf32>
    %252 = math.tanh %251 : vector<2x32xf32>
    %253 = arith.subf %215, %252 : vector<2x32xf32>
    %254 = arith.mulf %247, %253 : vector<2x32xf32>
    %255 = arith.addf %252, %254 : vector<2x32xf32>
    %256 = vector.extract_strided_slice %5 {offsets = [12, 0], sizes = [2, 96], strides = [1, 1]} : vector<16x96xf32> to vector<2x96xf32>
    %cst_39 = arith.constant dense<0.000000e+00> : vector<2x96xf32>
    %257 = tpu.matmul %236, %6, %cst_39 {dimension_numbers = #tpu.dot_dimension_numbers<[1], [0], [0], [1], [0, 0, 1, 1], [], []>} : vector<2x32xf32>, vector<32x96xf32>, vector<2x96xf32> -> vector<2x96xf32>
    %258 = vector.extract_strided_slice %256 {offsets = [0, 0], sizes = [2, 64], strides = [1, 1]} : vector<2x96xf32> to vector<2x64xf32>
    %259 = vector.extract_strided_slice %257 {offsets = [0, 0], sizes = [2, 64], strides = [1, 1]} : vector<2x96xf32> to vector<2x64xf32>
    %260 = arith.addf %258, %259 : vector<2x64xf32>
    %261 = arith.negf %260 : vector<2x64xf32>
    %262 = math.exp %261 : vector<2x64xf32>
    %cst_40 = arith.constant 1.000000e+00 : f32
    %263 = vector.broadcast %cst_40 : f32 to vector<2x64xf32>
    %264 = arith.addf %263, %262 : vector<2x64xf32>
    %265 = arith.divf %263, %264 : vector<2x64xf32>
    %266 = vector.extract_strided_slice %265 {offsets = [0, 0], sizes = [2, 32], strides = [1, 1]} : vector<2x64xf32> to vector<2x32xf32>
    %267 = vector.extract_strided_slice %265 {offsets = [0, 32], sizes = [2, 32], strides = [1, 1]} : vector<2x64xf32> to vector<2x32xf32>
    %268 = vector.extract_strided_slice %256 {offsets = [0, 64], sizes = [2, 32], strides = [1, 1]} : vector<2x96xf32> to vector<2x32xf32>
    %269 = vector.extract_strided_slice %257 {offsets = [0, 64], sizes = [2, 32], strides = [1, 1]} : vector<2x96xf32> to vector<2x32xf32>
    %270 = arith.addf %269, %13 : vector<2x32xf32>
    %271 = arith.mulf %266, %270 : vector<2x32xf32>
    %272 = arith.addf %268, %271 : vector<2x32xf32>
    %273 = math.tanh %272 : vector<2x32xf32>
    %274 = arith.subf %236, %273 : vector<2x32xf32>
    %275 = arith.mulf %267, %274 : vector<2x32xf32>
    %276 = arith.addf %273, %275 : vector<2x32xf32>
    %277 = tpu.concatenate %276, %255 in 1 : vector<2x32xf32>, vector<2x32xf32> -> vector<2x64xf32>
    %cst_41 = arith.constant dense<0.000000e+00> : vector<2x128xf32>
    %278 = tpu.matmul %277, %7, %cst_41 {dimension_numbers = #tpu.dot_dimension_numbers<[1], [0], [0], [1], [0, 0, 1, 1], [], []>} : vector<2x64xf32>, vector<64x128xf32>, vector<2x128xf32> -> vector<2x128xf32>
    %279 = arith.addf %278, %10 : vector<2x128xf32>
    %280 = vector.extract_strided_slice %279 {offsets = [0, 0], sizes = [2, 64], strides = [1, 1]} : vector<2x128xf32> to vector<2x64xf32>
    %281 = arith.negf %280 : vector<2x64xf32>
    %282 = math.exp %281 : vector<2x64xf32>
    %cst_42 = arith.constant 1.000000e+00 : f32
    %283 = vector.broadcast %cst_42 : f32 to vector<2x64xf32>
    %284 = arith.addf %283, %282 : vector<2x64xf32>
    %285 = arith.divf %283, %284 : vector<2x64xf32>
    %286 = vector.extract_strided_slice %285 {offsets = [0, 0], sizes = [2, 32], strides = [1, 1]} : vector<2x64xf32> to vector<2x32xf32>
    %287 = vector.extract_strided_slice %285 {offsets = [0, 32], sizes = [2, 32], strides = [1, 1]} : vector<2x64xf32> to vector<2x32xf32>
    %288 = vector.extract_strided_slice %279 {offsets = [0, 64], sizes = [2, 32], strides = [1, 1]} : vector<2x128xf32> to vector<2x32xf32>
    %289 = vector.extract_strided_slice %279 {offsets = [0, 96], sizes = [2, 32], strides = [1, 1]} : vector<2x128xf32> to vector<2x32xf32>
    %290 = arith.mulf %286, %289 : vector<2x32xf32>
    %291 = arith.addf %288, %290 : vector<2x32xf32>
    %292 = math.tanh %291 : vector<2x32xf32>
    %293 = arith.subf %255, %292 : vector<2x32xf32>
    %294 = arith.mulf %287, %293 : vector<2x32xf32>
    %295 = arith.addf %292, %294 : vector<2x32xf32>
    %296 = vector.extract_strided_slice %5 {offsets = [14, 0], sizes = [2, 96], strides = [1, 1]} : vector<16x96xf32> to vector<2x96xf32>
    %cst_43 = arith.constant dense<0.000000e+00> : vector<2x96xf32>
    %297 = tpu.matmul %276, %6, %cst_43 {dimension_numbers = #tpu.dot_dimension_numbers<[1], [0], [0], [1], [0, 0, 1, 1], [], []>} : vector<2x32xf32>, vector<32x96xf32>, vector<2x96xf32> -> vector<2x96xf32>
    %298 = vector.extract_strided_slice %296 {offsets = [0, 0], sizes = [2, 64], strides = [1, 1]} : vector<2x96xf32> to vector<2x64xf32>
    %299 = vector.extract_strided_slice %297 {offsets = [0, 0], sizes = [2, 64], strides = [1, 1]} : vector<2x96xf32> to vector<2x64xf32>
    %300 = arith.addf %298, %299 : vector<2x64xf32>
    %301 = arith.negf %300 : vector<2x64xf32>
    %302 = math.exp %301 : vector<2x64xf32>
    %cst_44 = arith.constant 1.000000e+00 : f32
    %303 = vector.broadcast %cst_44 : f32 to vector<2x64xf32>
    %304 = arith.addf %303, %302 : vector<2x64xf32>
    %305 = arith.divf %303, %304 : vector<2x64xf32>
    %306 = vector.extract_strided_slice %305 {offsets = [0, 0], sizes = [2, 32], strides = [1, 1]} : vector<2x64xf32> to vector<2x32xf32>
    %307 = vector.extract_strided_slice %305 {offsets = [0, 32], sizes = [2, 32], strides = [1, 1]} : vector<2x64xf32> to vector<2x32xf32>
    %308 = vector.extract_strided_slice %296 {offsets = [0, 64], sizes = [2, 32], strides = [1, 1]} : vector<2x96xf32> to vector<2x32xf32>
    %309 = vector.extract_strided_slice %297 {offsets = [0, 64], sizes = [2, 32], strides = [1, 1]} : vector<2x96xf32> to vector<2x32xf32>
    %310 = arith.addf %309, %13 : vector<2x32xf32>
    %311 = arith.mulf %306, %310 : vector<2x32xf32>
    %312 = arith.addf %308, %311 : vector<2x32xf32>
    %313 = math.tanh %312 : vector<2x32xf32>
    %314 = arith.subf %276, %313 : vector<2x32xf32>
    %315 = arith.mulf %307, %314 : vector<2x32xf32>
    %316 = arith.addf %313, %315 : vector<2x32xf32>
    %317 = tpu.concatenate %316, %295 in 1 : vector<2x32xf32>, vector<2x32xf32> -> vector<2x64xf32>
    %cst_45 = arith.constant dense<0.000000e+00> : vector<2x128xf32>
    %318 = tpu.matmul %317, %7, %cst_45 {dimension_numbers = #tpu.dot_dimension_numbers<[1], [0], [0], [1], [0, 0, 1, 1], [], []>} : vector<2x64xf32>, vector<64x128xf32>, vector<2x128xf32> -> vector<2x128xf32>
    %319 = arith.addf %318, %10 : vector<2x128xf32>
    %320 = vector.extract_strided_slice %319 {offsets = [0, 0], sizes = [2, 64], strides = [1, 1]} : vector<2x128xf32> to vector<2x64xf32>
    %321 = arith.negf %320 : vector<2x64xf32>
    %322 = math.exp %321 : vector<2x64xf32>
    %cst_46 = arith.constant 1.000000e+00 : f32
    %323 = vector.broadcast %cst_46 : f32 to vector<2x64xf32>
    %324 = arith.addf %323, %322 : vector<2x64xf32>
    %325 = arith.divf %323, %324 : vector<2x64xf32>
    %326 = vector.extract_strided_slice %325 {offsets = [0, 0], sizes = [2, 32], strides = [1, 1]} : vector<2x64xf32> to vector<2x32xf32>
    %327 = vector.extract_strided_slice %325 {offsets = [0, 32], sizes = [2, 32], strides = [1, 1]} : vector<2x64xf32> to vector<2x32xf32>
    %328 = vector.extract_strided_slice %319 {offsets = [0, 64], sizes = [2, 32], strides = [1, 1]} : vector<2x128xf32> to vector<2x32xf32>
    %329 = vector.extract_strided_slice %319 {offsets = [0, 96], sizes = [2, 32], strides = [1, 1]} : vector<2x128xf32> to vector<2x32xf32>
    %330 = arith.mulf %326, %329 : vector<2x32xf32>
    %331 = arith.addf %328, %330 : vector<2x32xf32>
    %332 = math.tanh %331 : vector<2x32xf32>
    %333 = arith.subf %295, %332 : vector<2x32xf32>
    %334 = arith.mulf %327, %333 : vector<2x32xf32>
    %335 = arith.addf %332, %334 : vector<2x32xf32>
    %c0_47 = arith.constant 0 : index
    %c0_48 = arith.constant 0 : index
    %336 = vector.load %arg8[%c0_47, %c0_48] : memref<32x1xf32, #tpu.memory_space<vmem>>, vector<32x1xf32>
    %cst_49 = arith.constant dense<0.000000e+00> : vector<2x1xf32>
    %337 = tpu.matmul %335, %336, %cst_49 {dimension_numbers = #tpu.dot_dimension_numbers<[1], [0], [0], [1], [0, 0, 1, 1], [], []>} : vector<2x32xf32>, vector<32x1xf32>, vector<2x1xf32> -> vector<2x1xf32>
    %c0_50 = arith.constant 0 : index
    %c0_51 = arith.constant 0 : index
    %338 = vector.load %arg9[%c0_50, %c0_51] : memref<1x1xf32, #tpu.memory_space<vmem>>, vector<1x1xf32>
    %339 = vector.broadcast %338 : vector<1x1xf32> to vector<2x1xf32>
    %340 = arith.addf %337, %339 : vector<2x1xf32>
    %c0_52 = arith.constant 0 : index
    %c0_53 = arith.constant 0 : index
    %341 = vector.load %arg10[%c0_52, %c0_53] : memref<2x1xf32, #tpu.memory_space<vmem>>, vector<2x1xf32>
    tpu.vector_store %arg10[%c0_52, %c0_53], %340 {strides = array<i32>} : memref<2x1xf32, #tpu.memory_space<vmem>>, vector<2x1xf32>,
    return
  }
  func.func @transform_0(%arg0: i32) -> (i32, i32) {
    %c0_i32 = arith.constant 0 : i32
    %c0_i32_0 = arith.constant 0 : i32
    %c0_i32_1 = arith.constant 0 : i32
    return %c0_i32, %c0_i32_0 : i32, i32
  }
  func.func @transform_1(%arg0: i32) -> (i32, i32) {
    %c0_i32 = arith.constant 0 : i32
    %c0_i32_0 = arith.constant 0 : i32
    %c0_i32_1 = arith.constant 0 : i32
    return %c0_i32, %c0_i32_0 : i32, i32
  }
  func.func @transform_2(%arg0: i32) -> (i32, i32) {
    %c0_i32 = arith.constant 0 : i32
    %c0_i32_0 = arith.constant 0 : i32
    %c0_i32_1 = arith.constant 0 : i32
    return %c0_i32, %c0_i32_0 : i32, i32
  }
  func.func @transform_3(%arg0: i32) -> (i32, i32) {
    %c0_i32 = arith.constant 0 : i32
    %c0_i32_0 = arith.constant 0 : i32
    %c0_i32_1 = arith.constant 0 : i32
    return %c0_i32, %c0_i32_0 : i32, i32
  }
  func.func @transform_4(%arg0: i32) -> (i32, i32) {
    %c0_i32 = arith.constant 0 : i32
    %c0_i32_0 = arith.constant 0 : i32
    %c0_i32_1 = arith.constant 0 : i32
    return %c0_i32, %c0_i32_0 : i32, i32
  }
  func.func @transform_5(%arg0: i32) -> (i32, i32) {
    %c0_i32 = arith.constant 0 : i32
    %c0_i32_0 = arith.constant 0 : i32
    %c0_i32_1 = arith.constant 0 : i32
    return %c0_i32, %c0_i32_0 : i32, i32
  }
  func.func @transform_6(%arg0: i32) -> (i32, i32) {
    %c0_i32 = arith.constant 0 : i32
    %c0_i32_0 = arith.constant 0 : i32
    %c0_i32_1 = arith.constant 0 : i32
    return %c0_i32, %c0_i32_0 : i32, i32
  }
  func.func @transform_7(%arg0: i32) -> (i32, i32) {
    %c0_i32 = arith.constant 0 : i32
    %c0_i32_0 = arith.constant 0 : i32
    %c0_i32_1 = arith.constant 0 : i32
    return %c0_i32, %c0_i32_0 : i32, i32
  }
  func.func @transform_8(%arg0: i32) -> (i32, i32) {
    %c0_i32 = arith.constant 0 : i32
    %c0_i32_0 = arith.constant 0 : i32
    %c0_i32_1 = arith.constant 0 : i32
    return %c0_i32, %c0_i32_0 : i32, i32
  }
  func.func @transform_9(%arg0: i32) -> (i32, i32) {
    %c0_i32 = arith.constant 0 : i32
    %c0_i32_0 = arith.constant 0 : i32
    %c0_i32_1 = arith.constant 0 : i32
    return %c0_i32, %c0_i32_0 : i32, i32
  }
}

</mosaic_0001>

<llo_original>
// kernel: tpu_custom_call.1
$region0: #{tpu_custom_call.1}
  #allocation0 [shape = 'u32[]', space=smem, size = 0x4, offset = 0x4, fixed_abs, tag = 'smem constant byte address 0x4 - core index']
  #allocation1 [shape = 'u32[72,128]{1,0:T(1,128)}', space=vmem, size = 0x9000, scoped, tag = 'internal scratch']
  #allocation2 [shape = 'f32[1,1]{1,0:T(1,128)S(1)}', space=vmem, size = 0x200, scoped, tag = 'scoped memory for tpu_custom_call.1']
  %s0 = inlined_call_operand.hbm [shape: f32[16,24], index: 0, kind: input, shape index: {}]
  %s1 = inlined_call_operand.hbm [shape: f32[24,96], index: 1, kind: input, shape index: {}]
  %s2 = inlined_call_operand.vmem [shape: f32[32,96], index: 2, kind: input, shape index: {}]
  %s3 = inlined_call_operand.vmem [shape: f32[1,96], index: 3, kind: input, shape index: {}]
  %s4 = inlined_call_operand.vmem [shape: f32[1,32], index: 4, kind: input, shape index: {}]
  %s5 = inlined_call_operand.hbm [shape: f32[64,128], index: 5, kind: input, shape index: {}]
  %s6 = inlined_call_operand.vmem [shape: f32[1,128], index: 6, kind: input, shape index: {}]
  %s7 = inlined_call_operand.vmem [shape: f32[32,1], index: 7, kind: input, shape index: {}]
  %s8 = inlined_call_operand.<no memory space> [shape: f32[1,1], index: 8, kind: input, shape index: {}]
  %s9 = inlined_call_operand.vmem [shape: f32[2,1], index: 9, kind: output, shape index: {}]
  %s10 = sld [smem:[#allocation0]]
  $region58: #{tpu_custom_call.1} parent=0
    _
  %s12 = ssub.s32 1, %s10
  %s13 = scalar_select 0, %s12, %s10
  %v14 = vstv %s8
  %15 = vst [vmem:[#allocation2] sm:$0x1] %v14
  $region1: #{tpu_custom_call.1} parent=0
    #allocation3 [shape = 'u8[8192]{0}', space=vmem, size = 0x2000, scoped, tag = 'input window, operand 0, single buffered']
    #allocation4 [shape = 's32[1]{0}', space=sflag, size = 0x4, scoped, tag = 'scoped memory for tpu_custom_call.1']
    #allocation5 [shape = 'u8[12288]{0}', space=vmem, size = 0x3000, scoped, tag = 'input window, operand 1, single buffered']
    #allocation6 [shape = 's32[1]{0}', space=sflag, size = 0x4, scoped, tag = 'scoped memory for tpu_custom_call.1']
    #allocation7 [shape = 'u8[32768]{0}', space=vmem, size = 0x8000, scoped, tag = 'input window, operand 5, single buffered']
    %16 = vsyncpa [#allocation4], 0
    %17 = vsyncpa [#allocation6], 0
    // Predicated region
    $region2: #{tpu_custom_call.1} parent=1 // pred_check
      _
    $region3: #{tpu_custom_call.1} parent=1 // pred_check_branch
      %19 = sbr.rel (0) target = $region5
    $region4: #{tpu_custom_call.1} parent=1 // pred_region
      %21 = vsyncadd [#allocation4], 0
      %s22 = sshll.u32 %s0, 4
      %s23 = int_to_ptr.hbm [resolvable:$true] %s22
      %s24 = sshll.u32 [#allocation3], 4
      %s25 = int_to_ptr.vmem [resolvable:$true] %s24
      %30 = dma.hbm_to_vmem [thread:$0]  %s23, 256, %s25, [#allocation4], 128, 128, 8
    $region5: #{tpu_custom_call.1} parent=1 // pred_fallthru
      _
    // Predicated region
    $region6: #{tpu_custom_call.1} parent=1 // pred_check
      _
    $region7: #{tpu_custom_call.1} parent=1 // pred_check_branch
      %32 = sbr.rel (0) target = $region9
    $region8: #{tpu_custom_call.1} parent=1 // pred_region
      %34 = vsyncadd [#allocation6], 0
      %s35 = sshll.u32 %s1, 4
      %s36 = int_to_ptr.hbm [resolvable:$true] %s35
      %s37 = sshll.u32 [#allocation5], 4
      %s38 = int_to_ptr.vmem [resolvable:$true] %s37
      %43 = dma.hbm_to_vmem [thread:$0]  %s36, 384, %s38, [#allocation6], 128, 128, 8
    $region9: #{tpu_custom_call.1} parent=1 // pred_fallthru
      _
    // Predicated region
    $region10: #{tpu_custom_call.1} parent=1 // pred_check
      _
    $region11: #{tpu_custom_call.1} parent=1 // pred_check_branch
      %45 = sbr.rel (0) target = $region13
    $region12: #{tpu_custom_call.1} parent=1 // pred_region
      _
    $region13: #{tpu_custom_call.1} parent=1 // pred_fallthru
      _
    // Predicated region
    $region14: #{tpu_custom_call.1} parent=1 // pred_check
      _
    $region15: #{tpu_custom_call.1} parent=1 // pred_check_branch
      %47 = sbr.rel (0) target = $region17
    $region16: #{tpu_custom_call.1} parent=1 // pred_region
      _
    $region17: #{tpu_custom_call.1} parent=1 // pred_fallthru
      _
    // Predicated region
    $region18: #{tpu_custom_call.1} parent=1 // pred_check
      _
    $region19: #{tpu_custom_call.1} parent=1 // pred_check_branch
      %49 = sbr.rel (0) target = $region21
    $region20: #{tpu_custom_call.1} parent=1 // pred_region
      _
    $region21: #{tpu_custom_call.1} parent=1 // pred_fallthru
      _
    // Predicated region
    $region22: #{tpu_custom_call.1} parent=1 // pred_check
      _
    $region23: #{tpu_custom_call.1} parent=1 // pred_check_branch
      %51 = sbr.rel (0) target = $region25
    $region24: #{tpu_custom_call.1} parent=1 // pred_region
      %53 = vsyncadd [#allocation6], 0
      %s54 = sshll.u32 %s5, 4
      %s55 = int_to_ptr.hbm [resolvable:$true] %s54
      %s56 = sshll.u32 [#allocation7], 4
      %s57 = int_to_ptr.vmem [resolvable:$true] %s56
      %62 = dma.hbm_to_vmem [thread:$0]  %s55, 1024, %s57, [#allocation6], 128, 128, 8
    $region25: #{tpu_custom_call.1} parent=1 // pred_fallthru
      _
    // Predicated region
    $region26: #{tpu_custom_call.1} parent=1 // pred_check
      _
    $region27: #{tpu_custom_call.1} parent=1 // pred_check_branch
      %64 = sbr.rel (0) target = $region29
    $region28: #{tpu_custom_call.1} parent=1 // pred_region
      _
    $region29: #{tpu_custom_call.1} parent=1 // pred_fallthru
      _
    // Predicated region
    $region30: #{tpu_custom_call.1} parent=1 // pred_check
      _
    $region31: #{tpu_custom_call.1} parent=1 // pred_check_branch
      %66 = sbr.rel (0) target = $region33
    $region32: #{tpu_custom_call.1} parent=1 // pred_region
      _
    $region33: #{tpu_custom_call.1} parent=1 // pred_fallthru
      _
    // Predicated region
    $region34: #{tpu_custom_call.1} parent=1 // pred_check
      _
    $region35: #{tpu_custom_call.1} parent=1 // pred_check_branch
      %68 = sbr.rel (0) target = $region37
    $region36: #{tpu_custom_call.1} parent=1 // pred_region
      _
    $region37: #{tpu_custom_call.1} parent=1 // pred_fallthru
      _
    // Predicated region
    $region38: #{tpu_custom_call.1} parent=1 // pred_check
      _
    $region39: #{tpu_custom_call.1} parent=1 // pred_check_branch
      %70 = sbr.rel (0) target = $region41
    $region40: #{tpu_custom_call.1} parent=1 // pred_region
      %72 = dma.done [#allocation4], 256
    $region41: #{tpu_custom_call.1} parent=1 // pred_fallthru
      _
    // Predicated region
    $region42: #{tpu_custom_call.1} parent=1 // pred_check
      _
    $region43: #{tpu_custom_call.1} parent=1 // pred_check_branch
      %74 = sbr.rel (0) target = $region45
    $region44: #{tpu_custom_call.1} parent=1 // pred_region
      %76 = dma.done [#allocation6], 384
    $region45: #{tpu_custom_call.1} parent=1 // pred_fallthru
      _
    // Predicated region
    $region46: #{tpu_custom_call.1} parent=1 // pred_check
      _
    $region47: #{tpu_custom_call.1} parent=1 // pred_check_branch
      %78 = sbr.rel (0) target = $region49
    $region48: #{tpu_custom_call.1} parent=1 // pred_region
      %80 = dma.done [#allocation6], 1024
    $region49: #{tpu_custom_call.1} parent=1 // pred_fallthru
      _
    %v81 = vld [vmem:[#allocation3] sm:$0xff]
    %v82 = vld [vmem:[#allocation3 + $0x8] sm:$0xff]
    %v83 = vld [vmem:[#allocation5] sm:$0xff]
    %v84 = vld [vmem:[#allocation5 + $0x8] sm:$0xff]
    %v85 = vld [vmem:[#allocation5 + $0x10] sm:$0xff]
    %v86 = vld [vmem:[%s3] sm:$0x1]
    %v88 = vperm.slane %v86, 0
    %vm90 = vcmask 195584
    %v92 = vsel %vm90, %v81, 0
    %v95 = vsel %vm90, %v82, 0
    %97 = vmatpush.msra.mxu0 0.0
    %98 = vmatpush.msra.mxu0 0.0
    %99 = vmatpush.msra.mxu0 0.0
    %100 = vmatpush.msra.mxu0 0.0
    %101 = vmatpush.msra.mxu0 0.0
    %102 = vmatpush.msra.mxu0 0.0
    %103 = vmatpush.msra.mxu0 0.0
    %104 = vmatpush.msra.mxu0 0.0
    %105 = vmatpush.msra.mxu0 0.0
    %106 = vmatpush.msra.mxu0 0.0
    %107 = vmatpush.msra.mxu0 0.0
    %108 = vmatpush.msra.mxu0 0.0
    %109 = vmatpush.msra.mxu0 0.0
    %110 = vmatpush.msra.mxu0 %v85
    %111 = vmatpush.msra.mxu0 %v84
    %112 = vmatpush.msra.mxu0 %v83
    %113 = vmatmul.f32.gmra.mxu0 %v92
    %v114 = vpop.f32.mrf.mxu0
    %v115 = vadd.f32 %v88, %v114
    %116 = vmatmul.f32.gmra.mxu0 %v95
    %v117 = vpop.f32.mrf.mxu0
    %v118 = vadd.f32 %v88, %v117
    %119 = vdwg.mxu0
    %v120 = vld [vmem:[%s2] sm:$0xff]
    %v121 = vld [vmem:[%s2 + $0x8] sm:$0xff]
    %v122 = vld [vmem:[%s2 + $0x10] sm:$0xff]
    %v123 = vld [vmem:[%s2 + $0x18] sm:$0xff]
    %v124 = vld [vmem:[#allocation7] sm:$0xff]
    %v125 = vld [vmem:[#allocation7 + $0x8] sm:$0xff]
    %v126 = vld [vmem:[#allocation7 + $0x10] sm:$0xff]
    %v127 = vld [vmem:[#allocation7 + $0x18] sm:$0xff]
    %v128 = vld [vmem:[#allocation7 + $0x20] sm:$0xff]
    %v129 = vld [vmem:[#allocation7 + $0x28] sm:$0xff]
    %v130 = vld [vmem:[#allocation7 + $0x30] sm:$0xff]
    %v131 = vld [vmem:[#allocation7 + $0x38] sm:$0xff]
    %v132 = vld [vmem:[%s6] sm:$0x1]
    %v134 = vperm.slane %v132, 0
    %v136 = vld [vmem:[%s4] sm:$0x1]
    %v138 = vperm.slane %v136, 0
    %vm139 = vcmask 261120
    %v141 = vsel %vm139, 0.0, 0
    %143 = vmatpush.msra.mxu0 0.0
    %144 = vmatpush.msra.mxu0 0.0
    %145 = vmatpush.msra.mxu0 0.0
    %146 = vmatpush.msra.mxu0 0.0
    %147 = vmatpush.msra.mxu0 0.0
    %148 = vmatpush.msra.mxu0 0.0
    %149 = vmatpush.msra.mxu0 0.0
    %150 = vmatpush.msra.mxu0 0.0
    %151 = vmatpush.msra.mxu0 0.0
    %152 = vmatpush.msra.mxu0 0.0
    %153 = vmatpush.msra.mxu0 0.0
    %154 = vmatpush.msra.mxu0 0.0
    %155 = vmatpush.msra.mxu0 %v123
    %156 = vmatpush.msra.mxu0 %v122
    %157 = vmatpush.msra.mxu0 %v121
    %158 = vmatpush.msra.mxu0 %v120
    %159 = vmatmul.f32.gmra.mxu0 %v141
    %v160 = vpop.f32.mrf.mxu0
    %v161 = vadd.f32 0.0, %v160
    %162 = vdwg.mxu0
    %v163 = vadd.f32 %v115, %v161
    %v164 = vxor.u32 %v163, 2147483648
    %v165 = vmul.f32 %v164, 1.442695
    %v166 = vpow.pop %v165
    %v167 = vadd.f32 %v166, 1.0
    %v168 = vrcp.pop %v167
    %v169 = vmul.f32 %v167, %v168
    %v170 = vsub.f32 1.0, %v169
    %v171 = vmul.f32 %v168, %v170
    %v172 = vadd.f32 %v168, %v171
    %vm173 = vweird.f32 %v167
    %vm174 = vweird.f32 %v168
    %vm175 = vmor %vm173, %vm174
    %v176 = vsel %vm175, %v168, %v172
    %v177 = vand.u32 2147483647, %v167
    %vm178 = vcmp.eq.f32.partialorder %v177, 8.507059e+37
    %v179 = vand.u32 %v167, 2147483648
    %v180 = vor.u32 1.1754944e-38, %v179
    %v181 = vsel %vm178, %v180, %v176
    %v182 = vmul.f32 1.0, %v181
    %183 = vrot.lane.b32.xlu0 %v138, 64
    %v184 = vpop.permute.xlu0 %183
    %v186 = vadd.f32 %v161, %v184
    %188 = vrot.lane.b32.xlu0 %v186, 64
    %v189 = vpop.permute.xlu0 %188
    %v191 = vmul.f32 %v182, %v189
    %193 = vrot.lane.b32.xlu0 %v191, 64
    %v194 = vpop.permute.xlu0 %193
    %v196 = vadd.f32 %v115, %v194
    %v197 = vtanh.pop %v196
    %v198 = vsub.f32 0.0, %v197
    %200 = vrot.lane.b32.xlu0 %v198, 96
    %v201 = vpop.permute.xlu0 %200
    %v203 = vmul.f32 %v182, %v201
    %205 = vrot.lane.b32.xlu0 %v203, 32
    %v206 = vpop.permute.xlu0 %205
    %v208 = vadd.f32 %v197, %v206
    %210 = vrot.lane.b32.xlu0 %v208, 64
    %v211 = vpop.permute.xlu0 %210
    %v213 = vsel %vm139, %v211, 0.0
    %vm214 = vcmask 523264
    %v216 = vsel %vm214, %v213, 0
    %218 = vmatpush.msra.mxu0 0.0
    %219 = vmatpush.msra.mxu0 0.0
    %220 = vmatpush.msra.mxu0 0.0
    %221 = vmatpush.msra.mxu0 0.0
    %222 = vmatpush.msra.mxu0 0.0
    %223 = vmatpush.msra.mxu0 0.0
    %224 = vmatpush.msra.mxu0 0.0
    %225 = vmatpush.msra.mxu0 0.0
    %226 = vmatpush.msra.mxu0 %v131
    %227 = vmatpush.msra.mxu0 %v130
    %228 = vmatpush.msra.mxu0 %v129
    %229 = vmatpush.msra.mxu0 %v128
    %230 = vmatpush.msra.mxu0 %v127
    %231 = vmatpush.msra.mxu0 %v126
    %232 = vmatpush.msra.mxu0 %v125
    %233 = vmatpush.msra.mxu0 %v124
    %234 = vmatmul.f32.gmra.mxu0 %v216
    %v235 = vpop.f32.mrf.mxu0
    %v236 = vadd.f32 %v134, %v235
    %237 = vdwg.mxu0
    %v238 = vxor.u32 %v236, 2147483648
    %v239 = vmul.f32 %v238, 1.442695
    %v240 = vpow.pop %v239
    %v241 = vadd.f32 %v240, 1.0
    %v242 = vrcp.pop %v241
    %v243 = vmul.f32 %v241, %v242
    %v244 = vsub.f32 1.0, %v243
    %v245 = vmul.f32 %v242, %v244
    %v246 = vadd.f32 %v242, %v245
    %vm247 = vweird.f32 %v241
    %vm248 = vweird.f32 %v242
    %vm249 = vmor %vm247, %vm248
    %v250 = vsel %vm249, %v242, %v246
    %v251 = vand.u32 2147483647, %v241
    %vm252 = vcmp.eq.f32.partialorder %v251, 8.507059e+37
    %v253 = vand.u32 %v241, 2147483648
    %v254 = vor.u32 1.1754944e-38, %v253
    %v255 = vsel %vm252, %v254, %v250
    %v256 = vmul.f32 1.0, %v255
    %258 = vrot.lane.b32.xlu0 %v236, 32
    %v259 = vpop.permute.xlu0 %258
    %v261 = vmul.f32 %v256, %v259
    %263 = vrot.lane.b32.xlu0 %v261, 64
    %v264 = vpop.permute.xlu0 %263
    %v266 = vadd.f32 %v236, %v264
    %v267 = vtanh.pop %v266
    %v268 = vsub.f32 0.0, %v267
    %270 = vrot.lane.b32.xlu0 %v268, 96
    %v271 = vpop.permute.xlu0 %270
    %v273 = vmul.f32 %v256, %v271
    %275 = vrot.lane.b32.xlu0 %v273, 32
    %v276 = vpop.permute.xlu0 %275
    %v278 = vadd.f32 %v267, %v276
    %v279 = vsel %vm139, %v211, 0
    %281 = vmatpush.msra.mxu0 0.0
    %282 = vmatpush.msra.mxu0 0.0
    %283 = vmatpush.msra.mxu0 0.0
    %284 = vmatpush.msra.mxu0 0.0
    %285 = vmatpush.msra.mxu0 0.0
    %286 = vmatpush.msra.mxu0 0.0
    %287 = vmatpush.msra.mxu0 0.0
    %288 = vmatpush.msra.mxu0 0.0
    %289 = vmatpush.msra.mxu0 0.0
    %290 = vmatpush.msra.mxu0 0.0
    %291 = vmatpush.msra.mxu0 0.0
    %292 = vmatpush.msra.mxu0 0.0
    %293 = vmatpush.msra.mxu0 %v123
    %294 = vmatpush.msra.mxu0 %v122
    %295 = vmatpush.msra.mxu0 %v121
    %296 = vmatpush.msra.mxu0 %v120
    %297 = vmatmul.f32.gmra.mxu0 %v279
    %v298 = vpop.f32.mrf.mxu0
    %v299 = vadd.f32 0.0, %v298
    %300 = vdwg.mxu0
    %v302 = vrot.slane %v299, 6
    %v304 = vadd.f32 %v115, %v302
    %v305 = vxor.u32 %v304, 2147483648
    %v306 = vmul.f32 %v305, 1.442695
    %v307 = vpow.pop %v306
    %v308 = vadd.f32 %v307, 1.0
    %v309 = vrcp.pop %v308
    %v310 = vmul.f32 %v308, %v309
    %v311 = vsub.f32 1.0, %v310
    %v312 = vmul.f32 %v309, %v311
    %v313 = vadd.f32 %v309, %v312
    %vm314 = vweird.f32 %v308
    %vm315 = vweird.f32 %v309
    %vm316 = vmor %vm314, %vm315
    %v317 = vsel %vm316, %v309, %v313
    %v318 = vand.u32 2147483647, %v308
    %vm319 = vcmp.eq.f32.partialorder %v318, 8.507059e+37
    %v320 = vand.u32 %v308, 2147483648
    %v321 = vor.u32 1.1754944e-38, %v320
    %v322 = vsel %vm319, %v321, %v317
    %v323 = vmul.f32 1.0, %v322
    %v324 = vadd.f32 %v299, %v184
    %v326 = vrot.slane %v324, 6
    %327 = vrot.lane.b32.xlu0 %v326, 64
    %v328 = vpop.permute.xlu0 %327
    %v330 = vmul.f32 %v323, %v328
    %332 = vrot.lane.b32.xlu0 %v330, 64
    %v333 = vpop.permute.xlu0 %332
    %v335 = vadd.f32 %v115, %v333
    %v336 = vtanh.pop %v335
    %v338 = vrot.slane %v336, 2
    %v340 = vsub.f32 %v208, %v338
    %v342 = vrot.slane %v340, 6
    %343 = vrot.lane.b32.xlu0 %v342, 96
    %v344 = vpop.permute.xlu0 %343
    %v346 = vmul.f32 %v323, %v344
    %348 = vrot.lane.b32.xlu0 %v346, 32
    %v349 = vpop.permute.xlu0 %348
    %v351 = vadd.f32 %v336, %v349
    %353 = vrot.lane.b32.xlu0 %v351, 64
    %v354 = vpop.permute.xlu0 %353
    %v357 = vrot.slane %v278, 6
    %358 = vrot.lane.b32.xlu0 %v357, 96
    %v359 = vpop.permute.xlu0 %358
    %v361 = vsel %vm139, %v354, %v359
    %v363 = vrot.slane %v361, 2
    %v364 = vsel %vm214, %v363, 0
    %366 = vmatpush.msra.mxu0 0.0
    %367 = vmatpush.msra.mxu0 0.0
    %368 = vmatpush.msra.mxu0 0.0
    %369 = vmatpush.msra.mxu0 0.0
    %370 = vmatpush.msra.mxu0 0.0
    %371 = vmatpush.msra.mxu0 0.0
    %372 = vmatpush.msra.mxu0 0.0
    %373 = vmatpush.msra.mxu0 0.0
    %374 = vmatpush.msra.mxu0 %v131
    %375 = vmatpush.msra.mxu0 %v130
    %376 = vmatpush.msra.mxu0 %v129
    %377 = vmatpush.msra.mxu0 %v128
    %378 = vmatpush.msra.mxu0 %v127
    %379 = vmatpush.msra.mxu0 %v126
    %380 = vmatpush.msra.mxu0 %v125
    %381 = vmatpush.msra.mxu0 %v124
    %382 = vmatmul.f32.gmra.mxu0 %v364
    %v383 = vpop.f32.mrf.mxu0
    %v384 = vadd.f32 %v134, %v383
    %385 = vdwg.mxu0
    %v386 = vxor.u32 %v384, 2147483648
    %v387 = vmul.f32 %v386, 1.442695
    %v388 = vpow.pop %v387
    %v389 = vadd.f32 %v388, 1.0
    %v390 = vrcp.pop %v389
    %v391 = vmul.f32 %v389, %v390
    %v392 = vsub.f32 1.0, %v391
    %v393 = vmul.f32 %v390, %v392
    %v394 = vadd.f32 %v390, %v393
    %vm395 = vweird.f32 %v389
    %vm396 = vweird.f32 %v390
    %vm397 = vmor %vm395, %vm396
    %v398 = vsel %vm397, %v390, %v394
    %v399 = vand.u32 2147483647, %v389
    %vm400 = vcmp.eq.f32.partialorder %v399, 8.507059e+37
    %v401 = vand.u32 %v389, 2147483648
    %v402 = vor.u32 1.1754944e-38, %v401
    %v403 = vsel %vm400, %v402, %v398
    %v404 = vmul.f32 1.0, %v403
    %406 = vrot.lane.b32.xlu0 %v384, 32
    %v407 = vpop.permute.xlu0 %406
    %v409 = vmul.f32 %v404, %v407
    %411 = vrot.lane.b32.xlu0 %v409, 64
    %v412 = vpop.permute.xlu0 %411
    %v414 = vadd.f32 %v384, %v412
    %v415 = vtanh.pop %v414
    %v416 = vsub.f32 %v278, %v415
    %418 = vrot.lane.b32.xlu0 %v416, 96
    %v419 = vpop.permute.xlu0 %418
    %v421 = vmul.f32 %v404, %v419
    %423 = vrot.lane.b32.xlu0 %v421, 32
    %v424 = vpop.permute.xlu0 %423
    %v426 = vadd.f32 %v415, %v424
    %v427 = vrot.slane %v351, 2
    %428 = vrot.lane.b32.xlu0 %v427, 64
    %v429 = vpop.permute.xlu0 %428
    %v430 = vsel %vm139, %v429, 0
    %432 = vmatpush.msra.mxu0 0.0
    %433 = vmatpush.msra.mxu0 0.0
    %434 = vmatpush.msra.mxu0 0.0
    %435 = vmatpush.msra.mxu0 0.0
    %436 = vmatpush.msra.mxu0 0.0
    %437 = vmatpush.msra.mxu0 0.0
    %438 = vmatpush.msra.mxu0 0.0
    %439 = vmatpush.msra.mxu0 0.0
    %440 = vmatpush.msra.mxu0 0.0
    %441 = vmatpush.msra.mxu0 0.0
    %442 = vmatpush.msra.mxu0 0.0
    %443 = vmatpush.msra.mxu0 0.0
    %444 = vmatpush.msra.mxu0 %v123
    %445 = vmatpush.msra.mxu0 %v122
    %446 = vmatpush.msra.mxu0 %v121
    %447 = vmatpush.msra.mxu0 %v120
    %448 = vmatmul.f32.gmra.mxu0 %v430
    %v449 = vpop.f32.mrf.mxu0
    %v450 = vadd.f32 0.0, %v449
    %451 = vdwg.mxu0
    %v453 = vrot.slane %v450, 4
    %v455 = vadd.f32 %v115, %v453
    %v456 = vxor.u32 %v455, 2147483648
    %v457 = vmul.f32 %v456, 1.442695
    %v458 = vpow.pop %v457
    %v459 = vadd.f32 %v458, 1.0
    %v460 = vrcp.pop %v459
    %v461 = vmul.f32 %v459, %v460
    %v462 = vsub.f32 1.0, %v461
    %v463 = vmul.f32 %v460, %v462
    %v464 = vadd.f32 %v460, %v463
    %vm465 = vweird.f32 %v459
    %vm466 = vweird.f32 %v460
    %vm467 = vmor %vm465, %vm466
    %v468 = vsel %vm467, %v460, %v464
    %v469 = vand.u32 2147483647, %v459
    %vm470 = vcmp.eq.f32.partialorder %v469, 8.507059e+37
    %v471 = vand.u32 %v459, 2147483648
    %v472 = vor.u32 1.1754944e-38, %v471
    %v473 = vsel %vm470, %v472, %v468
    %v474 = vmul.f32 1.0, %v473
    %v475 = vadd.f32 %v450, %v184
    %v477 = vrot.slane %v475, 4
    %478 = vrot.lane.b32.xlu0 %v477, 64
    %v479 = vpop.permute.xlu0 %478
    %v481 = vmul.f32 %v474, %v479
    %483 = vrot.lane.b32.xlu0 %v481, 64
    %v484 = vpop.permute.xlu0 %483
    %v486 = vadd.f32 %v115, %v484
    %v487 = vtanh.pop %v486
    %v489 = vrot.slane %v487, 2
    %v491 = vsub.f32 %v351, %v489
    %v493 = vrot.slane %v491, 6
    %494 = vrot.lane.b32.xlu0 %v493, 96
    %v495 = vpop.permute.xlu0 %494
    %v497 = vmul.f32 %v474, %v495
    %499 = vrot.lane.b32.xlu0 %v497, 32
    %v500 = vpop.permute.xlu0 %499
    %v502 = vadd.f32 %v487, %v500
    %504 = vrot.lane.b32.xlu0 %v502, 64
    %v505 = vpop.permute.xlu0 %504
    %v508 = vrot.slane %v426, 4
    %509 = vrot.lane.b32.xlu0 %v508, 96
    %v510 = vpop.permute.xlu0 %509
    %v512 = vsel %vm139, %v505, %v510
    %v514 = vrot.slane %v512, 4
    %v515 = vsel %vm214, %v514, 0
    %517 = vmatpush.msra.mxu0 0.0
    %518 = vmatpush.msra.mxu0 0.0
    %519 = vmatpush.msra.mxu0 0.0
    %520 = vmatpush.msra.mxu0 0.0
    %521 = vmatpush.msra.mxu0 0.0
    %522 = vmatpush.msra.mxu0 0.0
    %523 = vmatpush.msra.mxu0 0.0
    %524 = vmatpush.msra.mxu0 0.0
    %525 = vmatpush.msra.mxu0 %v131
    %526 = vmatpush.msra.mxu0 %v130
    %527 = vmatpush.msra.mxu0 %v129
    %528 = vmatpush.msra.mxu0 %v128
    %529 = vmatpush.msra.mxu0 %v127
    %530 = vmatpush.msra.mxu0 %v126
    %531 = vmatpush.msra.mxu0 %v125
    %532 = vmatpush.msra.mxu0 %v124
    %533 = vmatmul.f32.gmra.mxu0 %v515
    %v534 = vpop.f32.mrf.mxu0
    %v535 = vadd.f32 %v134, %v534
    %536 = vdwg.mxu0
    %v537 = vxor.u32 %v535, 2147483648
    %v538 = vmul.f32 %v537, 1.442695
    %v539 = vpow.pop %v538
    %v540 = vadd.f32 %v539, 1.0
    %v541 = vrcp.pop %v540
    %v542 = vmul.f32 %v540, %v541
    %v543 = vsub.f32 1.0, %v542
    %v544 = vmul.f32 %v541, %v543
    %v545 = vadd.f32 %v541, %v544
    %vm546 = vweird.f32 %v540
    %vm547 = vweird.f32 %v541
    %vm548 = vmor %vm546, %vm547
    %v549 = vsel %vm548, %v541, %v545
    %v550 = vand.u32 2147483647, %v540
    %vm551 = vcmp.eq.f32.partialorder %v550, 8.507059e+37
    %v552 = vand.u32 %v540, 2147483648
    %v553 = vor.u32 1.1754944e-38, %v552
    %v554 = vsel %vm551, %v553, %v549
    %v555 = vmul.f32 1.0, %v554
    %557 = vrot.lane.b32.xlu0 %v535, 32
    %v558 = vpop.permute.xlu0 %557
    %v560 = vmul.f32 %v555, %v558
    %562 = vrot.lane.b32.xlu0 %v560, 64
    %v563 = vpop.permute.xlu0 %562
    %v565 = vadd.f32 %v535, %v563
    %v566 = vtanh.pop %v565
    %v567 = vsub.f32 %v426, %v566
    %569 = vrot.lane.b32.xlu0 %v567, 96
    %v570 = vpop.permute.xlu0 %569
    %v572 = vmul.f32 %v555, %v570
    %574 = vrot.lane.b32.xlu0 %v572, 32
    %v575 = vpop.permute.xlu0 %574
    %v577 = vadd.f32 %v566, %v575
    %v578 = vrot.slane %v502, 4
    %579 = vrot.lane.b32.xlu0 %v578, 64
    %v580 = vpop.permute.xlu0 %579
    %v581 = vsel %vm139, %v580, 0
    %583 = vmatpush.msra.mxu0 0.0
    %584 = vmatpush.msra.mxu0 0.0
    %585 = vmatpush.msra.mxu0 0.0
    %586 = vmatpush.msra.mxu0 0.0
    %587 = vmatpush.msra.mxu0 0.0
    %588 = vmatpush.msra.mxu0 0.0
    %589 = vmatpush.msra.mxu0 0.0
    %590 = vmatpush.msra.mxu0 0.0
    %591 = vmatpush.msra.mxu0 0.0
    %592 = vmatpush.msra.mxu0 0.0
    %593 = vmatpush.msra.mxu0 0.0
    %594 = vmatpush.msra.mxu0 0.0
    %595 = vmatpush.msra.mxu0 %v123
    %596 = vmatpush.msra.mxu0 %v122
    %597 = vmatpush.msra.mxu0 %v121
    %598 = vmatpush.msra.mxu0 %v120
    %599 = vmatmul.f32.gmra.mxu0 %v581
    %v600 = vpop.f32.mrf.mxu0
    %v601 = vadd.f32 0.0, %v600
    %602 = vdwg.mxu0
    %v604 = vrot.slane %v601, 2
    %v606 = vadd.f32 %v115, %v604
    %v607 = vxor.u32 %v606, 2147483648
    %v608 = vmul.f32 %v607, 1.442695
    %v609 = vpow.pop %v608
    %v610 = vadd.f32 %v609, 1.0
    %v611 = vrcp.pop %v610
    %v612 = vmul.f32 %v610, %v611
    %v613 = vsub.f32 1.0, %v612
    %v614 = vmul.f32 %v611, %v613
    %v615 = vadd.f32 %v611, %v614
    %vm616 = vweird.f32 %v610
    %vm617 = vweird.f32 %v611
    %vm618 = vmor %vm616, %vm617
    %v619 = vsel %vm618, %v611, %v615
    %v620 = vand.u32 2147483647, %v610
    %vm621 = vcmp.eq.f32.partialorder %v620, 8.507059e+37
    %v622 = vand.u32 %v610, 2147483648
    %v623 = vor.u32 1.1754944e-38, %v622
    %v624 = vsel %vm621, %v623, %v619
    %v625 = vmul.f32 1.0, %v624
    %v626 = vadd.f32 %v601, %v184
    %v628 = vrot.slane %v626, 2
    %629 = vrot.lane.b32.xlu0 %v628, 64
    %v630 = vpop.permute.xlu0 %629
    %v632 = vmul.f32 %v625, %v630
    %634 = vrot.lane.b32.xlu0 %v632, 64
    %v635 = vpop.permute.xlu0 %634
    %v637 = vadd.f32 %v115, %v635
    %v638 = vtanh.pop %v637
    %v640 = vrot.slane %v638, 2
    %v642 = vsub.f32 %v502, %v640
    %v644 = vrot.slane %v642, 6
    %645 = vrot.lane.b32.xlu0 %v644, 96
    %v646 = vpop.permute.xlu0 %645
    %v648 = vmul.f32 %v625, %v646
    %650 = vrot.lane.b32.xlu0 %v648, 32
    %v651 = vpop.permute.xlu0 %650
    %v653 = vadd.f32 %v638, %v651
    %655 = vrot.lane.b32.xlu0 %v653, 64
    %v656 = vpop.permute.xlu0 %655
    %v659 = vrot.slane %v577, 2
    %660 = vrot.lane.b32.xlu0 %v659, 96
    %v661 = vpop.permute.xlu0 %660
    %v663 = vsel %vm139, %v656, %v661
    %v665 = vrot.slane %v663, 6
    %v666 = vsel %vm214, %v665, 0
    %668 = vmatpush.msra.mxu0 0.0
    %669 = vmatpush.msra.mxu0 0.0
    %670 = vmatpush.msra.mxu0 0.0
    %671 = vmatpush.msra.mxu0 0.0
    %672 = vmatpush.msra.mxu0 0.0
    %673 = vmatpush.msra.mxu0 0.0
    %674 = vmatpush.msra.mxu0 0.0
    %675 = vmatpush.msra.mxu0 0.0
    %676 = vmatpush.msra.mxu0 %v131
    %677 = vmatpush.msra.mxu0 %v130
    %678 = vmatpush.msra.mxu0 %v129
    %679 = vmatpush.msra.mxu0 %v128
    %680 = vmatpush.msra.mxu0 %v127
    %681 = vmatpush.msra.mxu0 %v126
    %682 = vmatpush.msra.mxu0 %v125
    %683 = vmatpush.msra.mxu0 %v124
    %684 = vmatmul.f32.gmra.mxu0 %v666
    %v685 = vpop.f32.mrf.mxu0
    %v686 = vadd.f32 %v134, %v685
    %687 = vdwg.mxu0
    %v688 = vxor.u32 %v686, 2147483648
    %v689 = vmul.f32 %v688, 1.442695
    %v690 = vpow.pop %v689
    %v691 = vadd.f32 %v690, 1.0
    %v692 = vrcp.pop %v691
    %v693 = vmul.f32 %v691, %v692
    %v694 = vsub.f32 1.0, %v693
    %v695 = vmul.f32 %v692, %v694
    %v696 = vadd.f32 %v692, %v695
    %vm697 = vweird.f32 %v691
    %vm698 = vweird.f32 %v692
    %vm699 = vmor %vm697, %vm698
    %v700 = vsel %vm699, %v692, %v696
    %v701 = vand.u32 2147483647, %v691
    %vm702 = vcmp.eq.f32.partialorder %v701, 8.507059e+37
    %v703 = vand.u32 %v691, 2147483648
    %v704 = vor.u32 1.1754944e-38, %v703
    %v705 = vsel %vm702, %v704, %v700
    %v706 = vmul.f32 1.0, %v705
    %708 = vrot.lane.b32.xlu0 %v686, 32
    %v709 = vpop.permute.xlu0 %708
    %v711 = vmul.f32 %v706, %v709
    %713 = vrot.lane.b32.xlu0 %v711, 64
    %v714 = vpop.permute.xlu0 %713
    %v716 = vadd.f32 %v686, %v714
    %v717 = vtanh.pop %v716
    %v718 = vsub.f32 %v577, %v717
    %720 = vrot.lane.b32.xlu0 %v718, 96
    %v721 = vpop.permute.xlu0 %720
    %v723 = vmul.f32 %v706, %v721
    %725 = vrot.lane.b32.xlu0 %v723, 32
    %v726 = vpop.permute.xlu0 %725
    %v728 = vadd.f32 %v717, %v726
    %v729 = vrot.slane %v653, 6
    %730 = vrot.lane.b32.xlu0 %v729, 64
    %v731 = vpop.permute.xlu0 %730
    %v732 = vsel %vm139, %v731, 0
    %734 = vmatpush.msra.mxu0 0.0
    %735 = vmatpush.msra.mxu0 0.0
    %736 = vmatpush.msra.mxu0 0.0
    %737 = vmatpush.msra.mxu0 0.0
    %738 = vmatpush.msra.mxu0 0.0
    %739 = vmatpush.msra.mxu0 0.0
    %740 = vmatpush.msra.mxu0 0.0
    %741 = vmatpush.msra.mxu0 0.0
    %742 = vmatpush.msra.mxu0 0.0
    %743 = vmatpush.msra.mxu0 0.0
    %744 = vmatpush.msra.mxu0 0.0
    %745 = vmatpush.msra.mxu0 0.0
    %746 = vmatpush.msra.mxu0 %v123
    %747 = vmatpush.msra.mxu0 %v122
    %748 = vmatpush.msra.mxu0 %v121
    %749 = vmatpush.msra.mxu0 %v120
    %750 = vmatmul.f32.gmra.mxu0 %v732
    %v751 = vpop.f32.mrf.mxu0
    %v752 = vadd.f32 0.0, %v751
    %753 = vdwg.mxu0
    %v754 = vadd.f32 %v118, %v752
    %v755 = vxor.u32 %v754, 2147483648
    %v756 = vmul.f32 %v755, 1.442695
    %v757 = vpow.pop %v756
    %v758 = vadd.f32 %v757, 1.0
    %v759 = vrcp.pop %v758
    %v760 = vmul.f32 %v758, %v759
    %v761 = vsub.f32 1.0, %v760
    %v762 = vmul.f32 %v759, %v761
    %v763 = vadd.f32 %v759, %v762
    %vm764 = vweird.f32 %v758
    %vm765 = vweird.f32 %v759
    %vm766 = vmor %vm764, %vm765
    %v767 = vsel %vm766, %v759, %v763
    %v768 = vand.u32 2147483647, %v758
    %vm769 = vcmp.eq.f32.partialorder %v768, 8.507059e+37
    %v770 = vand.u32 %v758, 2147483648
    %v771 = vor.u32 1.1754944e-38, %v770
    %v772 = vsel %vm769, %v771, %v767
    %v773 = vmul.f32 1.0, %v772
    %v774 = vadd.f32 %v752, %v184
    %776 = vrot.lane.b32.xlu0 %v774, 64
    %v777 = vpop.permute.xlu0 %776
    %v779 = vmul.f32 %v773, %v777
    %781 = vrot.lane.b32.xlu0 %v779, 64
    %v782 = vpop.permute.xlu0 %781
    %v784 = vadd.f32 %v118, %v782
    %v785 = vtanh.pop %v784
    %v787 = vrot.slane %v785, 2
    %v789 = vsub.f32 %v653, %v787
    %v791 = vrot.slane %v789, 6
    %792 = vrot.lane.b32.xlu0 %v791, 96
    %v793 = vpop.permute.xlu0 %792
    %v795 = vmul.f32 %v773, %v793
    %797 = vrot.lane.b32.xlu0 %v795, 32
    %v798 = vpop.permute.xlu0 %797
    %v800 = vadd.f32 %v785, %v798
    %802 = vrot.lane.b32.xlu0 %v800, 64
    %v803 = vpop.permute.xlu0 %802
    %806 = vrot.lane.b32.xlu0 %v728, 96
    %v807 = vpop.permute.xlu0 %806
    %v809 = vsel %vm139, %v803, %v807
    %v811 = vsel %vm214, %v809, 0
    %813 = vmatpush.msra.mxu0 0.0
    %814 = vmatpush.msra.mxu0 0.0
    %815 = vmatpush.msra.mxu0 0.0
    %816 = vmatpush.msra.mxu0 0.0
    %817 = vmatpush.msra.mxu0 0.0
    %818 = vmatpush.msra.mxu0 0.0
    %819 = vmatpush.msra.mxu0 0.0
    %820 = vmatpush.msra.mxu0 0.0
    %821 = vmatpush.msra.mxu0 %v131
    %822 = vmatpush.msra.mxu0 %v130
    %823 = vmatpush.msra.mxu0 %v129
    %824 = vmatpush.msra.mxu0 %v128
    %825 = vmatpush.msra.mxu0 %v127
    %826 = vmatpush.msra.mxu0 %v126
    %827 = vmatpush.msra.mxu0 %v125
    %828 = vmatpush.msra.mxu0 %v124
    %829 = vmatmul.f32.gmra.mxu0 %v811
    %v830 = vpop.f32.mrf.mxu0
    %v831 = vadd.f32 %v134, %v830
    %832 = vdwg.mxu0
    %v833 = vxor.u32 %v831, 2147483648
    %v834 = vmul.f32 %v833, 1.442695
    %v835 = vpow.pop %v834
    %v836 = vadd.f32 %v835, 1.0
    %v837 = vrcp.pop %v836
    %v838 = vmul.f32 %v836, %v837
    %v839 = vsub.f32 1.0, %v838
    %v840 = vmul.f32 %v837, %v839
    %v841 = vadd.f32 %v837, %v840
    %vm842 = vweird.f32 %v836
    %vm843 = vweird.f32 %v837
    %vm844 = vmor %vm842, %vm843
    %v845 = vsel %vm844, %v837, %v841
    %v846 = vand.u32 2147483647, %v836
    %vm847 = vcmp.eq.f32.partialorder %v846, 8.507059e+37
    %v848 = vand.u32 %v836, 2147483648
    %v849 = vor.u32 1.1754944e-38, %v848
    %v850 = vsel %vm847, %v849, %v845
    %v851 = vmul.f32 1.0, %v850
    %853 = vrot.lane.b32.xlu0 %v831, 32
    %v854 = vpop.permute.xlu0 %853
    %v856 = vmul.f32 %v851, %v854
    %858 = vrot.lane.b32.xlu0 %v856, 64
    %v859 = vpop.permute.xlu0 %858
    %v861 = vadd.f32 %v831, %v859
    %v862 = vtanh.pop %v861
    %v863 = vsub.f32 %v728, %v862
    %865 = vrot.lane.b32.xlu0 %v863, 96
    %v866 = vpop.permute.xlu0 %865
    %v868 = vmul.f32 %v851, %v866
    %870 = vrot.lane.b32.xlu0 %v868, 32
    %v871 = vpop.permute.xlu0 %870
    %v873 = vadd.f32 %v862, %v871
    %v874 = vsel %vm139, %v803, 0
    %876 = vmatpush.msra.mxu0 0.0
    %877 = vmatpush.msra.mxu0 0.0
    %878 = vmatpush.msra.mxu0 0.0
    %879 = vmatpush.msra.mxu0 0.0
    %880 = vmatpush.msra.mxu0 0.0
    %881 = vmatpush.msra.mxu0 0.0
    %882 = vmatpush.msra.mxu0 0.0
    %883 = vmatpush.msra.mxu0 0.0
    %884 = vmatpush.msra.mxu0 0.0
    %885 = vmatpush.msra.mxu0 0.0
    %886 = vmatpush.msra.mxu0 0.0
    %887 = vmatpush.msra.mxu0 0.0
    %888 = vmatpush.msra.mxu0 %v123
    %889 = vmatpush.msra.mxu0 %v122
    %890 = vmatpush.msra.mxu0 %v121
    %891 = vmatpush.msra.mxu0 %v120
    %892 = vmatmul.f32.gmra.mxu0 %v874
    %v893 = vpop.f32.mrf.mxu0
    %v894 = vadd.f32 0.0, %v893
    %895 = vdwg.mxu0
    %v897 = vrot.slane %v894, 6
    %v899 = vadd.f32 %v118, %v897
    %v900 = vxor.u32 %v899, 2147483648
    %v901 = vmul.f32 %v900, 1.442695
    %v902 = vpow.pop %v901
    %v903 = vadd.f32 %v902, 1.0
    %v904 = vrcp.pop %v903
    %v905 = vmul.f32 %v903, %v904
    %v906 = vsub.f32 1.0, %v905
    %v907 = vmul.f32 %v904, %v906
    %v908 = vadd.f32 %v904, %v907
    %vm909 = vweird.f32 %v903
    %vm910 = vweird.f32 %v904
    %vm911 = vmor %vm909, %vm910
    %v912 = vsel %vm911, %v904, %v908
    %v913 = vand.u32 2147483647, %v903
    %vm914 = vcmp.eq.f32.partialorder %v913, 8.507059e+37
    %v915 = vand.u32 %v903, 2147483648
    %v916 = vor.u32 1.1754944e-38, %v915
    %v917 = vsel %vm914, %v916, %v912
    %v918 = vmul.f32 1.0, %v917
    %v919 = vadd.f32 %v894, %v184
    %v921 = vrot.slane %v919, 6
    %922 = vrot.lane.b32.xlu0 %v921, 64
    %v923 = vpop.permute.xlu0 %922
    %v925 = vmul.f32 %v918, %v923
    %927 = vrot.lane.b32.xlu0 %v925, 64
    %v928 = vpop.permute.xlu0 %927
    %v930 = vadd.f32 %v118, %v928
    %v931 = vtanh.pop %v930
    %v933 = vrot.slane %v931, 2
    %v935 = vsub.f32 %v800, %v933
    %v937 = vrot.slane %v935, 6
    %938 = vrot.lane.b32.xlu0 %v937, 96
    %v939 = vpop.permute.xlu0 %938
    %v941 = vmul.f32 %v918, %v939
    %943 = vrot.lane.b32.xlu0 %v941, 32
    %v944 = vpop.permute.xlu0 %943
    %v946 = vadd.f32 %v931, %v944
    %948 = vrot.lane.b32.xlu0 %v946, 64
    %v949 = vpop.permute.xlu0 %948
    %v952 = vrot.slane %v873, 6
    %953 = vrot.lane.b32.xlu0 %v952, 96
    %v954 = vpop.permute.xlu0 %953
    %v956 = vsel %vm139, %v949, %v954
    %v958 = vrot.slane %v956, 2
    %v959 = vsel %vm214, %v958, 0
    %961 = vmatpush.msra.mxu0 0.0
    %962 = vmatpush.msra.mxu0 0.0
    %963 = vmatpush.msra.mxu0 0.0
    %964 = vmatpush.msra.mxu0 0.0
    %965 = vmatpush.msra.mxu0 0.0
    %966 = vmatpush.msra.mxu0 0.0
    %967 = vmatpush.msra.mxu0 0.0
    %968 = vmatpush.msra.mxu0 0.0
    %969 = vmatpush.msra.mxu0 %v131
    %970 = vmatpush.msra.mxu0 %v130
    %971 = vmatpush.msra.mxu0 %v129
    %972 = vmatpush.msra.mxu0 %v128
    %973 = vmatpush.msra.mxu0 %v127
    %974 = vmatpush.msra.mxu0 %v126
    %975 = vmatpush.msra.mxu0 %v125
    %976 = vmatpush.msra.mxu0 %v124
    %977 = vmatmul.f32.gmra.mxu0 %v959
    %v978 = vpop.f32.mrf.mxu0
    %v979 = vadd.f32 %v134, %v978
    %980 = vdwg.mxu0
    %v981 = vxor.u32 %v979, 2147483648
    %v982 = vmul.f32 %v981, 1.442695
    %v983 = vpow.pop %v982
    %v984 = vadd.f32 %v983, 1.0
    %v985 = vrcp.pop %v984
    %v986 = vmul.f32 %v984, %v985
    %v987 = vsub.f32 1.0, %v986
    %v988 = vmul.f32 %v985, %v987
    %v989 = vadd.f32 %v985, %v988
    %vm990 = vweird.f32 %v984
    %vm991 = vweird.f32 %v985
    %vm992 = vmor %vm990, %vm991
    %v993 = vsel %vm992, %v985, %v989
    %v994 = vand.u32 2147483647, %v984
    %vm995 = vcmp.eq.f32.partialorder %v994, 8.507059e+37
    %v996 = vand.u32 %v984, 2147483648
    %v997 = vor.u32 1.1754944e-38, %v996
    %v998 = vsel %vm995, %v997, %v993
    %v999 = vmul.f32 1.0, %v998
    %1001 = vrot.lane.b32.xlu0 %v979, 32
    %v1002 = vpop.permute.xlu0 %1001
    %v1004 = vmul.f32 %v999, %v1002
    %1006 = vrot.lane.b32.xlu0 %v1004, 64
    %v1007 = vpop.permute.xlu0 %1006
    %v1009 = vadd.f32 %v979, %v1007
    %v1010 = vtanh.pop %v1009
    %v1011 = vsub.f32 %v873, %v1010
    %1013 = vrot.lane.b32.xlu0 %v1011, 96
    %v1014 = vpop.permute.xlu0 %1013
    %v1016 = vmul.f32 %v999, %v1014
    %1018 = vrot.lane.b32.xlu0 %v1016, 32
    %v1019 = vpop.permute.xlu0 %1018
    %v1021 = vadd.f32 %v1010, %v1019
    %v1022 = vrot.slane %v946, 2
    %1023 = vrot.lane.b32.xlu0 %v1022, 64
    %v1024 = vpop.permute.xlu0 %1023
    %v1025 = vsel %vm139, %v1024, 0
    %1027 = vmatpush.msra.mxu0 0.0
    %1028 = vmatpush.msra.mxu0 0.0
    %1029 = vmatpush.msra.mxu0 0.0
    %1030 = vmatpush.msra.mxu0 0.0
    %1031 = vmatpush.msra.mxu0 0.0
    %1032 = vmatpush.msra.mxu0 0.0
    %1033 = vmatpush.msra.mxu0 0.0
    %1034 = vmatpush.msra.mxu0 0.0
    %1035 = vmatpush.msra.mxu0 0.0
    %1036 = vmatpush.msra.mxu0 0.0
    %1037 = vmatpush.msra.mxu0 0.0
    %1038 = vmatpush.msra.mxu0 0.0
    %1039 = vmatpush.msra.mxu0 %v123
    %1040 = vmatpush.msra.mxu0 %v122
    %1041 = vmatpush.msra.mxu0 %v121
    %1042 = vmatpush.msra.mxu0 %v120
    %1043 = vmatmul.f32.gmra.mxu0 %v1025
    %v1044 = vpop.f32.mrf.mxu0
    %v1045 = vadd.f32 0.0, %v1044
    %1046 = vdwg.mxu0
    %v1048 = vrot.slane %v1045, 4
    %v1050 = vadd.f32 %v118, %v1048
    %v1051 = vxor.u32 %v1050, 2147483648
    %v1052 = vmul.f32 %v1051, 1.442695
    %v1053 = vpow.pop %v1052
    %v1054 = vadd.f32 %v1053, 1.0
    %v1055 = vrcp.pop %v1054
    %v1056 = vmul.f32 %v1054, %v1055
    %v1057 = vsub.f32 1.0, %v1056
    %v1058 = vmul.f32 %v1055, %v1057
    %v1059 = vadd.f32 %v1055, %v1058
    %vm1060 = vweird.f32 %v1054
    %vm1061 = vweird.f32 %v1055
    %vm1062 = vmor %vm1060, %vm1061
    %v1063 = vsel %vm1062, %v1055, %v1059
    %v1064 = vand.u32 2147483647, %v1054
    %vm1065 = vcmp.eq.f32.partialorder %v1064, 8.507059e+37
    %v1066 = vand.u32 %v1054, 2147483648
    %v1067 = vor.u32 1.1754944e-38, %v1066
    %v1068 = vsel %vm1065, %v1067, %v1063
    %v1069 = vmul.f32 1.0, %v1068
    %v1070 = vadd.f32 %v1045, %v184
    %v1072 = vrot.slane %v1070, 4
    %1073 = vrot.lane.b32.xlu0 %v1072, 64
    %v1074 = vpop.permute.xlu0 %1073
    %v1076 = vmul.f32 %v1069, %v1074
    %1078 = vrot.lane.b32.xlu0 %v1076, 64
    %v1079 = vpop.permute.xlu0 %1078
    %v1081 = vadd.f32 %v118, %v1079
    %v1082 = vtanh.pop %v1081
    %v1084 = vrot.slane %v1082, 2
    %v1086 = vsub.f32 %v946, %v1084
    %v1088 = vrot.slane %v1086, 6
    %1089 = vrot.lane.b32.xlu0 %v1088, 96
    %v1090 = vpop.permute.xlu0 %1089
    %v1092 = vmul.f32 %v1069, %v1090
    %1094 = vrot.lane.b32.xlu0 %v1092, 32
    %v1095 = vpop.permute.xlu0 %1094
    %v1097 = vadd.f32 %v1082, %v1095
    %1099 = vrot.lane.b32.xlu0 %v1097, 64
    %v1100 = vpop.permute.xlu0 %1099
    %v1103 = vrot.slane %v1021, 4
    %1104 = vrot.lane.b32.xlu0 %v1103, 96
    %v1105 = vpop.permute.xlu0 %1104
    %v1107 = vsel %vm139, %v1100, %v1105
    %v1109 = vrot.slane %v1107, 4
    %v1110 = vsel %vm214, %v1109, 0
    %1112 = vmatpush.msra.mxu0 0.0
    %1113 = vmatpush.msra.mxu0 0.0
    %1114 = vmatpush.msra.mxu0 0.0
    %1115 = vmatpush.msra.mxu0 0.0
    %1116 = vmatpush.msra.mxu0 0.0
    %1117 = vmatpush.msra.mxu0 0.0
    %1118 = vmatpush.msra.mxu0 0.0
    %1119 = vmatpush.msra.mxu0 0.0
    %1120 = vmatpush.msra.mxu0 %v131
    %1121 = vmatpush.msra.mxu0 %v130
    %1122 = vmatpush.msra.mxu0 %v129
    %1123 = vmatpush.msra.mxu0 %v128
    %1124 = vmatpush.msra.mxu0 %v127
    %1125 = vmatpush.msra.mxu0 %v126
    %1126 = vmatpush.msra.mxu0 %v125
    %1127 = vmatpush.msra.mxu0 %v124
    %1128 = vmatmul.f32.gmra.mxu0 %v1110
    %v1129 = vpop.f32.mrf.mxu0
    %v1130 = vadd.f32 %v134, %v1129
    %1131 = vdwg.mxu0
    %v1132 = vxor.u32 %v1130, 2147483648
    %v1133 = vmul.f32 %v1132, 1.442695
    %v1134 = vpow.pop %v1133
    %v1135 = vadd.f32 %v1134, 1.0
    %v1136 = vrcp.pop %v1135
    %v1137 = vmul.f32 %v1135, %v1136
    %v1138 = vsub.f32 1.0, %v1137
    %v1139 = vmul.f32 %v1136, %v1138
    %v1140 = vadd.f32 %v1136, %v1139
    %vm1141 = vweird.f32 %v1135
    %vm1142 = vweird.f32 %v1136
    %vm1143 = vmor %vm1141, %vm1142
    %v1144 = vsel %vm1143, %v1136, %v1140
    %v1145 = vand.u32 2147483647, %v1135
    %vm1146 = vcmp.eq.f32.partialorder %v1145, 8.507059e+37
    %v1147 = vand.u32 %v1135, 2147483648
    %v1148 = vor.u32 1.1754944e-38, %v1147
    %v1149 = vsel %vm1146, %v1148, %v1144
    %v1150 = vmul.f32 1.0, %v1149
    %1152 = vrot.lane.b32.xlu0 %v1130, 32
    %v1153 = vpop.permute.xlu0 %1152
    %v1155 = vmul.f32 %v1150, %v1153
    %1157 = vrot.lane.b32.xlu0 %v1155, 64
    %v1158 = vpop.permute.xlu0 %1157
    %v1160 = vadd.f32 %v1130, %v1158
    %v1161 = vtanh.pop %v1160
    %v1162 = vsub.f32 %v1021, %v1161
    %1164 = vrot.lane.b32.xlu0 %v1162, 96
    %v1165 = vpop.permute.xlu0 %1164
    %v1167 = vmul.f32 %v1150, %v1165
    %1169 = vrot.lane.b32.xlu0 %v1167, 32
    %v1170 = vpop.permute.xlu0 %1169
    %v1172 = vadd.f32 %v1161, %v1170
    %v1173 = vrot.slane %v1097, 4
    %1174 = vrot.lane.b32.xlu0 %v1173, 64
    %v1175 = vpop.permute.xlu0 %1174
    %v1176 = vsel %vm139, %v1175, 0
    %1178 = vmatpush.msra.mxu0 0.0
    %1179 = vmatpush.msra.mxu0 0.0
    %1180 = vmatpush.msra.mxu0 0.0
    %1181 = vmatpush.msra.mxu0 0.0
    %1182 = vmatpush.msra.mxu0 0.0
    %1183 = vmatpush.msra.mxu0 0.0
    %1184 = vmatpush.msra.mxu0 0.0
    %1185 = vmatpush.msra.mxu0 0.0
    %1186 = vmatpush.msra.mxu0 0.0
    %1187 = vmatpush.msra.mxu0 0.0
    %1188 = vmatpush.msra.mxu0 0.0
    %1189 = vmatpush.msra.mxu0 0.0
    %1190 = vmatpush.msra.mxu0 %v123
    %1191 = vmatpush.msra.mxu0 %v122
    %1192 = vmatpush.msra.mxu0 %v121
    %1193 = vmatpush.msra.mxu0 %v120
    %1194 = vmatmul.f32.gmra.mxu0 %v1176
    %v1195 = vpop.f32.mrf.mxu0
    %v1196 = vadd.f32 0.0, %v1195
    %1197 = vdwg.mxu0
    %v1199 = vrot.slane %v1196, 2
    %v1201 = vadd.f32 %v118, %v1199
    %v1202 = vxor.u32 %v1201, 2147483648
    %v1203 = vmul.f32 %v1202, 1.442695
    %v1204 = vpow.pop %v1203
    %v1205 = vadd.f32 %v1204, 1.0
    %v1206 = vrcp.pop %v1205
    %v1207 = vmul.f32 %v1205, %v1206
    %v1208 = vsub.f32 1.0, %v1207
    %v1209 = vmul.f32 %v1206, %v1208
    %v1210 = vadd.f32 %v1206, %v1209
    %vm1211 = vweird.f32 %v1205
    %vm1212 = vweird.f32 %v1206
    %vm1213 = vmor %vm1211, %vm1212
    %v1214 = vsel %vm1213, %v1206, %v1210
    %v1215 = vand.u32 2147483647, %v1205
    %vm1216 = vcmp.eq.f32.partialorder %v1215, 8.507059e+37
    %v1217 = vand.u32 %v1205, 2147483648
    %v1218 = vor.u32 1.1754944e-38, %v1217
    %v1219 = vsel %vm1216, %v1218, %v1214
    %v1220 = vmul.f32 1.0, %v1219
    %v1221 = vadd.f32 %v1196, %v184
    %v1223 = vrot.slane %v1221, 2
    %1224 = vrot.lane.b32.xlu0 %v1223, 64
    %v1225 = vpop.permute.xlu0 %1224
    %v1227 = vmul.f32 %v1220, %v1225
    %1229 = vrot.lane.b32.xlu0 %v1227, 64
    %v1230 = vpop.permute.xlu0 %1229
    %v1232 = vadd.f32 %v118, %v1230
    %v1233 = vtanh.pop %v1232
    %v1235 = vrot.slane %v1233, 2
    %v1237 = vsub.f32 %v1097, %v1235
    %v1239 = vrot.slane %v1237, 6
    %1240 = vrot.lane.b32.xlu0 %v1239, 96
    %v1241 = vpop.permute.xlu0 %1240
    %v1243 = vmul.f32 %v1220, %v1241
    %1245 = vrot.lane.b32.xlu0 %v1243, 32
    %v1246 = vpop.permute.xlu0 %1245
    %v1248 = vadd.f32 %v1233, %v1246
    %1250 = vrot.lane.b32.xlu0 %v1248, 64
    %v1251 = vpop.permute.xlu0 %1250
    %v1254 = vrot.slane %v1172, 2
    %1255 = vrot.lane.b32.xlu0 %v1254, 96
    %v1256 = vpop.permute.xlu0 %1255
    %v1258 = vsel %vm139, %v1251, %v1256
    %v1260 = vrot.slane %v1258, 6
    %v1261 = vsel %vm214, %v1260, 0
    %1263 = vmatpush.msra.mxu0 0.0
    %1264 = vmatpush.msra.mxu0 0.0
    %1265 = vmatpush.msra.mxu0 0.0
    %1266 = vmatpush.msra.mxu0 0.0
    %1267 = vmatpush.msra.mxu0 0.0
    %1268 = vmatpush.msra.mxu0 0.0
    %1269 = vmatpush.msra.mxu0 0.0
    %1270 = vmatpush.msra.mxu0 0.0
    %1271 = vmatpush.msra.mxu0 %v131
    %1272 = vmatpush.msra.mxu0 %v130
    %1273 = vmatpush.msra.mxu0 %v129
    %1274 = vmatpush.msra.mxu0 %v128
    %1275 = vmatpush.msra.mxu0 %v127
    %1276 = vmatpush.msra.mxu0 %v126
    %1277 = vmatpush.msra.mxu0 %v125
    %1278 = vmatpush.msra.mxu0 %v124
    %1279 = vmatmul.f32.gmra.mxu0 %v1261
    %v1280 = vpop.f32.mrf.mxu0
    %v1281 = vadd.f32 %v134, %v1280
    %1282 = vdwg.mxu0
    %v1283 = vxor.u32 %v1281, 2147483648
    %v1284 = vmul.f32 %v1283, 1.442695
    %v1285 = vpow.pop %v1284
    %v1286 = vadd.f32 %v1285, 1.0
    %v1287 = vrcp.pop %v1286
    %v1288 = vmul.f32 %v1286, %v1287
    %v1289 = vsub.f32 1.0, %v1288
    %v1290 = vmul.f32 %v1287, %v1289
    %v1291 = vadd.f32 %v1287, %v1290
    %vm1292 = vweird.f32 %v1286
    %vm1293 = vweird.f32 %v1287
    %vm1294 = vmor %vm1292, %vm1293
    %v1295 = vsel %vm1294, %v1287, %v1291
    %v1296 = vand.u32 2147483647, %v1286
    %vm1297 = vcmp.eq.f32.partialorder %v1296, 8.507059e+37
    %v1298 = vand.u32 %v1286, 2147483648
    %v1299 = vor.u32 1.1754944e-38, %v1298
    %v1300 = vsel %vm1297, %v1299, %v1295
    %v1301 = vmul.f32 1.0, %v1300
    %1303 = vrot.lane.b32.xlu0 %v1281, 32
    %v1304 = vpop.permute.xlu0 %1303
    %v1306 = vmul.f32 %v1301, %v1304
    %1308 = vrot.lane.b32.xlu0 %v1306, 64
    %v1309 = vpop.permute.xlu0 %1308
    %v1311 = vadd.f32 %v1281, %v1309
    %v1312 = vtanh.pop %v1311
    %v1313 = vsub.f32 %v1172, %v1312
    %1315 = vrot.lane.b32.xlu0 %v1313, 96
    %v1316 = vpop.permute.xlu0 %1315
    %v1318 = vmul.f32 %v1301, %v1316
    %1320 = vrot.lane.b32.xlu0 %v1318, 32
    %v1321 = vpop.permute.xlu0 %1320
    %v1323 = vadd.f32 %v1312, %v1321
    %v1324 = vld [vmem:[%s7] sm:$0xff]
    %v1325 = vld [vmem:[%s7 + $0x8] sm:$0xff]
    %v1326 = vld [vmem:[%s7 + $0x10] sm:$0xff]
    %v1327 = vld [vmem:[%s7 + $0x18] sm:$0xff]
    %v1328 = vld [vmem:[#allocation2] sm:$0x1]
    %v1330 = vperm.slane %v1328, 0
    %1333 = vrot.lane.b32.xlu0 %v1323, 64
    %v1334 = vpop.permute.xlu0 %1333
    %v1335 = vsel %vm139, %v1334, 0
    %1337 = vmatpush.msra.mxu0 0.0
    %1338 = vmatpush.msra.mxu0 0.0
    %1339 = vmatpush.msra.mxu0 0.0
    %1340 = vmatpush.msra.mxu0 0.0
    %1341 = vmatpush.msra.mxu0 0.0
    %1342 = vmatpush.msra.mxu0 0.0
    %1343 = vmatpush.msra.mxu0 0.0
    %1344 = vmatpush.msra.mxu0 0.0
    %1345 = vmatpush.msra.mxu0 0.0
    %1346 = vmatpush.msra.mxu0 0.0
    %1347 = vmatpush.msra.mxu0 0.0
    %1348 = vmatpush.msra.mxu0 0.0
    %1349 = vmatpush.msra.mxu0 %v1327
    %1350 = vmatpush.msra.mxu0 %v1326
    %1351 = vmatpush.msra.mxu0 %v1325
    %1352 = vmatpush.msra.mxu0 %v1324
    %1353 = vmatmul.f32.gmra.mxu0 %v1335
    %v1354 = vpop.f32.mrf.mxu0
    %v1355 = vadd.f32 %v1330, %v1354
    %1356 = vdwg.mxu0
    %vm1357 = vcmask 1024
    %1358 = vst.msk [vmem:[%s9] sm:$0x3] %vm1357, %v1355
    // Predicated region
    $region50: #{tpu_custom_call.1} parent=1 // pred_check
      _
    $region51: #{tpu_custom_call.1} parent=1 // pred_check_branch
      %1360 = sbr.rel (0) target = $region53
    $region52: #{tpu_custom_call.1} parent=1 // pred_region
      _
    $region53: #{tpu_custom_call.1} parent=1 // pred_fallthru
      _
    // Predicated region
    $region54: #{tpu_custom_call.1} parent=1 // pred_check
      _
    $region55: #{tpu_custom_call.1} parent=1 // pred_check_branch
      %1362 = sbr.rel (0) target = $region57
    $region56: #{tpu_custom_call.1} parent=1 // pred_region
      _
    $region57: #{tpu_custom_call.1} parent=1 // pred_fallthru
      _
    %1363 = vsyncpa [#allocation4], 1
    %1364 = vsyncpa [#allocation6], 1

</llo_original>
